<compile_context>
chip_gen: v5e
topology: v5e:2x2
jax: 0.10.0
libtpu: 0.0.40
codegen_flags: <defaults>
</compile_context>

<pallas_src>
import jax
import jax.numpy as jnp
import numpy as np
from jax import lax
from jax.experimental import pallas as pl
from jax.experimental.pallas import tpu as pltpu

# ---- model hyper-parameters (PyTorch defaults) ------------------------------
NUM_INPUTS = 4
HIDDEN     = 16
ACTION_DIM = 16
IMG_H = IMG_W = 8
C1, C2 = 32, 32
K1, K2 = 4, 2
H1, W1 = IMG_H - K1 + 1, IMG_W - K1 + 1        # 5, 5   (conv1 output)
H2, W2 = H1 - K2 + 1, W1 - K2 + 1              # 4, 4   (conv2 output)
NSIZE  = C2 * H2 * W2                          # 512

P   = IMG_H * IMG_W                            # 64 pixels / image
P1  = H1 * W1                                  # 25 valid conv1 positions / image
P2R = (H2 - 1) * W1 + W2                       # 19 conv2 rows computed / image
# conv2 tap offsets into the 5-wide conv1 grid are (0, 1, W1, W1+1); the furthest tap of
# row P2R-1 is 18 + 6 = 24 < 25, so every tap stays inside the 25-row conv1 slab.

MAX_TB = 256                                   # images per grid step

# im2col tap table: conv1 position r (= h1*W1 + w1) -> its 16 tap pixels (built once).
_POS      = np.array([h1 * IMG_W + w1 for h1 in range(H1) for w1 in range(W1)], np.int32)
_TAP_OFFS = np.array([kh * IMG_W + kw for kh in range(K1) for kw in range(K1)], np.int32)
TAP_IDX   = _POS[:, None] + _TAP_OFFS[None, :]            # (25, 16), max index 63 < 64

# packed bf16 weight-slab row offsets (all multiples of 32 -> tile aligned)
OFF_W1 = 0                                   # (64, 32)  conv1, K=64
OFF_W2 = OFF_W1 + K1 * K1 * NUM_INPUTS       # (128,32)  conv2, 4 x K=32 blocks
OFF_WL = OFF_W2 + K2 * K2 * C1               # (512,32)  flatten-linear (cols 16: zero)
OFF_WH = OFF_WL + H2 * W2 * C2               # (32, 32)  fused heads, first layer
OFF_WO = OFF_WH + 2 * HIDDEN                 # (32, 32)  fused heads, output (cols 2: zero)
WSLAB_ROWS = OFF_WO + 2 * HIDDEN             # 768


# ---- Pallas kernel -----------------------------------------------------------
def cnnbase_kernel(xp_ref, act_ref, wslab_ref, bslab_ref, q_ref, out1_scr, out2_scr):
    TB = act_ref.shape[0]                    # images in this tile
    NP2 = P2R * TB                           # conv2 rows in this tile
    bf16 = jnp.bfloat16

    # ---- conv1 (4x4 valid): ONE K=64 matmul on the wrapper-built im2col slab ----
    w1 = wslab_ref[OFF_W1:OFF_W1 + K1 * K1 * NUM_INPUTS, :]
    out1 = jnp.dot(xp_ref[...], w1, preferred_element_type=jnp.float32) + bslab_ref[0:1, :]
    out1_scr[...] = jnp.maximum(out1, 0.0).astype(bf16)     # (25*TB, 32) bf16

    # ---- conv2 (2x2 valid): 4 accumulating K=32 matmuls on contiguous shifted views ----
    acc2 = jnp.dot(out1_scr[0:NP2, :], wslab_ref[OFF_W2:OFF_W2 + C1, :],
                   preferred_element_type=jnp.float32)
    for j, off in ((1, 1), (2, W1), (3, W1 + 1)):
        acc2 = acc2 + jnp.dot(out1_scr[off * TB: off * TB + NP2, :],
                              wslab_ref[OFF_W2 + j * C1: OFF_W2 + (j + 1) * C1, :],
                              preferred_element_type=jnp.float32)
    # rows with w1 == 4 (3 per image) are finite garbage and never read below
    out2_scr[...] = jnp.maximum(acc2 + bslab_ref[1:2, :], 0.0).astype(bf16)   # (19*TB, 32)

    # ---- NCHW flatten + Linear(512,16): 16 contiguous row blocks -> ONE K=512 matmul ----
    wl = wslab_ref[OFF_WL:OFF_WL + H2 * W2 * C2, :]                  # (512, 32), cols 16: zero
    lhs3 = jnp.concatenate(
        [out2_scr[(h2 * W1 + w2) * TB:(h2 * W1 + w2) * TB + TB, :]
         for h2 in range(H2) for w2 in range(W2)],
        axis=-1)                                                     # (TB, 512) bf16
    hid = jnp.maximum(jnp.dot(lhs3, wl, preferred_element_type=jnp.float32)
                      + bslab_ref[2:3, :], 0.0)                      # (TB, 32), cols 16: == 0

    # ---- fused critic heads; action pre-shifted into lanes 16:32, so concat == add ----
    wh = wslab_ref[OFF_WH:OFF_WH + 2 * HIDDEN, :]                    # (32, 32)
    wo = wslab_ref[OFF_WO:OFF_WO + 2 * HIDDEN, :]                    # (32, 32), cols 2: zero
    oa = (hid + act_ref[...]).astype(bf16)                           # (TB, 32) = [hid | action]
    h = jnp.maximum(jnp.dot(oa, wh, preferred_element_type=jnp.float32)
                    + bslab_ref[3:4, :], 0.0)                        # (TB, 32): [head1 | head2]
    q = jnp.dot(h.astype(bf16), wo, preferred_element_type=jnp.float32) + bslab_ref[4:5, :]
    q_ref[...] = q[:, 0:2]                                           # col 0 = q1, col 1 = q2


# ---- one-time weight packing (hoisted out of the per-call forward path) ------
def prepare_weight_slabs(params):
    f32, bf16 = jnp.float32, jnp.bfloat16
    # conv weights: torch OIHW -> ((kh*K+kw)*Cin + c, Cout)
    w1 = jnp.transpose(params["w_conv1"], (2, 3, 1, 0)).reshape(K1 * K1 * NUM_INPUTS, C1)
    w2 = jnp.transpose(params["w_conv2"], (2, 3, 1, 0)).reshape(K2 * K2 * C1, C2)
    # Linear(512,16): torch col index = c*16 + h2*4 + w2  ->  row = (h2*4+w2)*32 + c
    wl = jnp.transpose(params["w_lin"].reshape(HIDDEN, C2, H2, W2), (2, 3, 1, 0)
                       ).reshape(H2 * W2 * C2, HIDDEN)
    wl = jnp.pad(wl, ((0, 0), (0, C1 - HIDDEN)))                     # lane-pad 16 -> 32 (zeros)
    # fused head first layer: [hidden|action] inputs x [head1|head2] outputs
    wh = jnp.concatenate([params["w_c1a"].T, params["w_c2a"].T], axis=1)          # (32, 32)
    # fused head output: block-diagonal (32, 2), lane-padded to 32
    wo = jnp.zeros((2 * HIDDEN, C1), f32)
    wo = wo.at[:HIDDEN, 0].set(params["w_c1o"][0, :]).at[HIDDEN:, 1].set(params["w_c2o"][0, :])
    wslab = jnp.concatenate([w1, w2, wl, wh, wo], axis=0).astype(bf16)            # (768, 32)
    assert wslab.shape == (WSLAB_ROWS, C1)

    def pad32(v):
        v = v.reshape(1, -1)
        return jnp.pad(v, ((0, 0), (0, C1 - v.shape[1])))
    bslab = jnp.concatenate([
        pad32(params["b_conv1"]),                                           # row 0
        pad32(params["b_conv2"]),                                           # row 1
        pad32(params["b_lin"]),                                             # row 2
        pad32(jnp.concatenate([params["b_c1a"], params["b_c2a"]])),         # row 3
        pad32(jnp.concatenate([params["b_c1o"], params["b_c2o"]])),         # row 4
    ], axis=0).astype(f32)                                                  # (5, 32)
    return wslab, bslab


# ---- forward: cheap per-call input prep + pallas_call -------------------------
@jax.jit
def cnnbase_forward(wslab, bslab, x_nchw, action):
    f32, bf16 = jnp.float32, jnp.bfloat16
    B = x_nchw.shape[0]
    # batch tile: multiple of 8, <= MAX_TB, and always >= 2 grid steps (keeps both v7x TCs busy)
    half = (B + 1) // 2
    TB = min(MAX_TB, ((half + 7) // 8) * 8)
    NT = max(2, -(-B // TB))
    Bp = NT * TB

    # bf16 NHWC pixel rows; im2col over the 25 valid conv1 positions only (no halo padding)
    x_pix = jnp.transpose(x_nchw, (0, 2, 3, 1)).reshape(B, P, NUM_INPUTS).astype(bf16)
    x_pix = jnp.pad(x_pix, ((0, Bp - B), (0, 0), (0, 0)))
    patches = x_pix[:, TAP_IDX, :].reshape(Bp, P1, K1 * K1 * NUM_INPUTS)     # (Bp, 25, 64)
    # spatial-major / batch-minor rows inside each tile: row = pos*TB + b_local
    patches = patches.reshape(NT, TB, P1, -1).transpose(0, 2, 1, 3)
    patches = patches.reshape(NT * P1 * TB, K1 * K1 * NUM_INPUTS)

    # action pre-shifted into lanes 16:32 of a (Bp, 32) slab (lanes 0:16 stay zero)
    act_p = jnp.pad(action.astype(f32),
                    ((0, Bp - B), (HIDDEN, C1 - HIDDEN - ACTION_DIM)))

    q = pl.pallas_call(
        cnnbase_kernel,
        out_shape=jax.ShapeDtypeStruct((Bp, 2), f32),
        grid=(NT,),
        in_specs=[
            pl.BlockSpec((P1 * TB, K1 * K1 * NUM_INPUTS), lambda i: (i, 0)),  # im2col tile
            pl.BlockSpec((TB, C1), lambda i: (i, 0)),                         # shifted action tile
            pl.BlockSpec((WSLAB_ROWS, C1), lambda i: (0, 0)),                 # packed weights
            pl.BlockSpec((5, C1), lambda i: (0, 0)),                          # packed biases
        ],
        out_specs=pl.BlockSpec((TB, 2), lambda i: (i, 0)),
        scratch_shapes=[
            pltpu.VMEM((P1 * TB, C1), jnp.bfloat16),    # conv1 outputs (25 pos / image), bf16
            pltpu.VMEM((P2R * TB, C2), jnp.bfloat16),   # conv2 row window (19 rows / image), bf16
        ],
        compiler_params=pltpu.CompilerParams(
            dimension_semantics=("parallel",),           # batch tiles shard across TCs (v7x)
            vmem_limit_bytes=16 * 1024 * 1024),          # ~5 MiB actual footprint at TB=256
    )(patches, act_p, wslab, bslab)
    return q[:B, 0:1], q[:B, 1:2]


# ---- deterministic parameter init (mirrors shapes of CNNBase.__init__) -------
def init_params(key):
    ortho = jax.nn.initializers.orthogonal(scale=float(np.sqrt(2.0)))
    ks = jax.random.split(key, 8)
    f32 = jnp.float32
    return {
        "w_conv1": ortho(ks[0], (C1, NUM_INPUTS, K1, K1), f32),
        "b_conv1": jnp.zeros((C1,), f32),
        "w_conv2": ortho(ks[1], (C2, C1, K2, K2), f32),
        "b_conv2": jnp.zeros((C2,), f32),
        "w_lin":   ortho(ks[2], (HIDDEN, NSIZE), f32),
        "b_lin":   jnp.zeros((HIDDEN,), f32),
        "w_c1a":   ortho(ks[3], (HIDDEN, HIDDEN + ACTION_DIM), f32),
        "b_c1a":   jnp.zeros((HIDDEN,), f32),
        "w_c1o":   0.01 * jax.random.normal(ks[4], (1, HIDDEN), f32),
        "b_c1o":   jnp.zeros((1,), f32),
        "w_c2a":   ortho(ks[5], (HIDDEN, HIDDEN + ACTION_DIM), f32),
        "b_c2a":   jnp.zeros((HIDDEN,), f32),
        "w_c2o":   0.01 * jax.random.normal(ks[6], (1, HIDDEN), f32),
        "b_c2o":   jnp.zeros((1,), f32),
    }


# ---- pure-JAX reference (NCHW, same math as the PyTorch module, f32 HIGHEST) --
def reference_forward(params, x, action):
    dn = ("NCHW", "OIHW", "NCHW")
    hp = lax.Precision.HIGHEST
    y = lax.conv_general_dilated(x, params["w_conv1"], (1, 1), "VALID",
                                 dimension_numbers=dn, precision=hp)
    y = jnp.maximum(y + params["b_conv1"][None, :, None, None], 0.0)
    y = lax.conv_general_dilated(y, params["w_conv2"], (1, 1), "VALID",
                                 dimension_numbers=dn, precision=hp)
    y = jnp.maximum(y + params["b_conv2"][None, :, None, None], 0.0)
    flat = y.reshape(y.shape[0], -1)
    hid = jnp.maximum(flat @ params["w_lin"].T + params["b_lin"], 0.0)
    oa = jnp.concatenate([hid, action], axis=-1)
    h1 = jnp.maximum(oa @ params["w_c1a"].T + params["b_c1a"], 0.0)
    q1 = h1 @ params["w_c1o"].T + params["b_c1o"]
    h2 = jnp.maximum(oa @ params["w_c2a"].T + params["b_c2a"], 0.0)
    q2 = h2 @ params["w_c2o"].T + params["b_c2o"]
    return q1, q2


if __name__ == "__main__":
    key = jax.random.PRNGKey(0)
    kp, kx, ka = jax.random.split(key, 3)
    params = init_params(kp)
    wslab, bslab = prepare_weight_slabs(params)    # hoisted: done once per weight update

    B = 2
    x = jax.random.normal(kx, (B, NUM_INPUTS, IMG_H, IMG_W), jnp.float32)
    action = jax.random.normal(ka, (B, ACTION_DIM), jnp.float32)

    q1, q2 = cnnbase_forward(wslab, bslab, x, action)
    jax.block_until_ready((q1, q2))

    r1, r2 = reference_forward(params, x, action)
    assert q1.shape == (B, 1) and q2.shape == (B, 1)
    # tolerance accounts for bf16 matmul operands (f32 accumulation) vs f32 reference
    np.testing.assert_allclose(np.asarray(q1), np.asarray(r1), rtol=2e-2, atol=5e-3)
    np.testing.assert_allclose(np.asarray(q2), np.asarray(r2), rtol=2e-2, atol=5e-3)
    print("KERNEL_OK")
</pallas_src>

<mosaic_0001>
module attributes {stable_mosaic.version = 11 : i64} {
  func.func @cnnbase_kernel(%arg0: i32, %arg1: memref<200x64xbf16, #tpu.memory_space<vmem>>, %arg2: memref<8x32xf32, #tpu.memory_space<vmem>>, %arg3: memref<768x32xbf16, #tpu.memory_space<vmem>>, %arg4: memref<5x32xf32, #tpu.memory_space<vmem>>, %arg5: memref<8x2xf32, #tpu.memory_space<vmem>>, %arg6: memref<200x32xbf16, #tpu.memory_space<vmem>>, %arg7: memref<152x32xbf16, #tpu.memory_space<vmem>>) attributes {dimension_semantics = [#tpu.dimension_semantics<parallel>], iteration_bounds = array<i64: 2>, scalar_prefetch = 0 : i64, scratch_operands = 2 : i64, tpu.core_type = #tpu.core_type<tc>, window_params = [{transform_indices = @transform_0, window_bounds = array<i64: 200, 64>}, {transform_indices = @transform_1, window_bounds = array<i64: 8, 32>}, {pipeline_mode = #tpu.pipeline_mode<synchronous>, transform_indices = @transform_2, window_bounds = array<i64: 768, 32>}, {pipeline_mode = #tpu.pipeline_mode<synchronous>, transform_indices = @transform_3, window_bounds = array<i64: 5, 32>}, {transform_indices = @transform_4, window_bounds = array<i64: 8, 2>}]} {
    %c0 = arith.constant 0 : index
    %c0_0 = arith.constant 0 : index
    %0 = vector.load %arg3[%c0, %c0_0] : memref<768x32xbf16, #tpu.memory_space<vmem>>, vector<64x32xbf16>
    %c0_1 = arith.constant 0 : index
    %c0_2 = arith.constant 0 : index
    %1 = vector.load %arg1[%c0_1, %c0_2] : memref<200x64xbf16, #tpu.memory_space<vmem>>, vector<200x64xbf16>
    %cst = arith.constant dense<0.000000e+00> : vector<200x32xf32>
    %2 = tpu.matmul %1, %0, %cst {dimension_numbers = #tpu.dot_dimension_numbers<[1], [0], [0], [1], [0, 0, 1, 1], [], []>} : vector<200x64xbf16>, vector<64x32xbf16>, vector<200x32xf32> -> vector<200x32xf32>
    %c0_3 = arith.constant 0 : index
    %c0_4 = arith.constant 0 : index
    %3 = vector.load %arg4[%c0_3, %c0_4] : memref<5x32xf32, #tpu.memory_space<vmem>>, vector<1x32xf32>
    %4 = vector.broadcast %3 : vector<1x32xf32> to vector<200x32xf32>
    %5 = arith.addf %2, %4 : vector<200x32xf32>
    %cst_5 = arith.constant 0.000000e+00 : f32
    %6 = vector.broadcast %cst_5 : f32 to vector<200x32xf32>
    %7 = arith.maximumf %5, %6 : vector<200x32xf32>
    %8 = arith.truncf %7 : vector<200x32xf32> to vector<200x32xbf16>
    %c0_6 = arith.constant 0 : index
    %c0_7 = arith.constant 0 : index
    %9 = vector.load %arg6[%c0_6, %c0_7] : memref<200x32xbf16, #tpu.memory_space<vmem>>, vector<200x32xbf16>
    tpu.vector_store %arg6[%c0_6, %c0_7], %8 {strides = array<i32>} : memref<200x32xbf16, #tpu.memory_space<vmem>>, vector<200x32xbf16>,
    %c0_8 = arith.constant 0 : index
    %c0_9 = arith.constant 0 : index
    %10 = vector.load %arg6[%c0_8, %c0_9] : memref<200x32xbf16, #tpu.memory_space<vmem>>, vector<152x32xbf16>
    %c64 = arith.constant 64 : index
    %c0_10 = arith.constant 0 : index
    %11 = vector.load %arg3[%c64, %c0_10] : memref<768x32xbf16, #tpu.memory_space<vmem>>, vector<32x32xbf16>
    %cst_11 = arith.constant dense<0.000000e+00> : vector<152x32xf32>
    %12 = tpu.matmul %10, %11, %cst_11 {dimension_numbers = #tpu.dot_dimension_numbers<[1], [0], [0], [1], [0, 0, 1, 1], [], []>} : vector<152x32xbf16>, vector<32x32xbf16>, vector<152x32xf32> -> vector<152x32xf32>
    %c8 = arith.constant 8 : index
    %c0_12 = arith.constant 0 : index
    %13 = vector.load %arg6[%c8, %c0_12] : memref<200x32xbf16, #tpu.memory_space<vmem>>, vector<152x32xbf16>
    %c96 = arith.constant 96 : index
    %c0_13 = arith.constant 0 : index
    %14 = vector.load %arg3[%c96, %c0_13] : memref<768x32xbf16, #tpu.memory_space<vmem>>, vector<32x32xbf16>
    %cst_14 = arith.constant dense<0.000000e+00> : vector<152x32xf32>
    %15 = tpu.matmul %13, %14, %cst_14 {dimension_numbers = #tpu.dot_dimension_numbers<[1], [0], [0], [1], [0, 0, 1, 1], [], []>} : vector<152x32xbf16>, vector<32x32xbf16>, vector<152x32xf32> -> vector<152x32xf32>
    %16 = arith.addf %12, %15 : vector<152x32xf32>
    %c40 = arith.constant 40 : index
    %c0_15 = arith.constant 0 : index
    %17 = vector.load %arg6[%c40, %c0_15] : memref<200x32xbf16, #tpu.memory_space<vmem>>, vector<152x32xbf16>
    %c128 = arith.constant 128 : index
    %c0_16 = arith.constant 0 : index
    %18 = vector.load %arg3[%c128, %c0_16] : memref<768x32xbf16, #tpu.memory_space<vmem>>, vector<32x32xbf16>
    %cst_17 = arith.constant dense<0.000000e+00> : vector<152x32xf32>
    %19 = tpu.matmul %17, %18, %cst_17 {dimension_numbers = #tpu.dot_dimension_numbers<[1], [0], [0], [1], [0, 0, 1, 1], [], []>} : vector<152x32xbf16>, vector<32x32xbf16>, vector<152x32xf32> -> vector<152x32xf32>
    %20 = arith.addf %16, %19 : vector<152x32xf32>
    %c48 = arith.constant 48 : index
    %c0_18 = arith.constant 0 : index
    %21 = vector.load %arg6[%c48, %c0_18] : memref<200x32xbf16, #tpu.memory_space<vmem>>, vector<152x32xbf16>
    %c160 = arith.constant 160 : index
    %c0_19 = arith.constant 0 : index
    %22 = vector.load %arg3[%c160, %c0_19] : memref<768x32xbf16, #tpu.memory_space<vmem>>, vector<32x32xbf16>
    %cst_20 = arith.constant dense<0.000000e+00> : vector<152x32xf32>
    %23 = tpu.matmul %21, %22, %cst_20 {dimension_numbers = #tpu.dot_dimension_numbers<[1], [0], [0], [1], [0, 0, 1, 1], [], []>} : vector<152x32xbf16>, vector<32x32xbf16>, vector<152x32xf32> -> vector<152x32xf32>
    %24 = arith.addf %20, %23 : vector<152x32xf32>
    %c1 = arith.constant 1 : index
    %c0_21 = arith.constant 0 : index
    %25 = vector.load %arg4[%c1, %c0_21] : memref<5x32xf32, #tpu.memory_space<vmem>>, vector<1x32xf32>
    %26 = vector.broadcast %25 : vector<1x32xf32> to vector<152x32xf32>
    %27 = arith.addf %24, %26 : vector<152x32xf32>
    %cst_22 = arith.constant 0.000000e+00 : f32
    %28 = vector.broadcast %cst_22 : f32 to vector<152x32xf32>
    %29 = arith.maximumf %27, %28 : vector<152x32xf32>
    %30 = arith.truncf %29 : vector<152x32xf32> to vector<152x32xbf16>
    %c0_23 = arith.constant 0 : index
    %c0_24 = arith.constant 0 : index
    %31 = vector.load %arg7[%c0_23, %c0_24] : memref<152x32xbf16, #tpu.memory_space<vmem>>, vector<152x32xbf16>
    tpu.vector_store %arg7[%c0_23, %c0_24], %30 {strides = array<i32>} : memref<152x32xbf16, #tpu.memory_space<vmem>>, vector<152x32xbf16>,
    %c192 = arith.constant 192 : index
    %c0_25 = arith.constant 0 : index
    %32 = vector.load %arg3[%c192, %c0_25] : memref<768x32xbf16, #tpu.memory_space<vmem>>, vector<512x32xbf16>
    %c0_26 = arith.constant 0 : index
    %c0_27 = arith.constant 0 : index
    %33 = vector.load %arg7[%c0_26, %c0_27] : memref<152x32xbf16, #tpu.memory_space<vmem>>, vector<8x32xbf16>
    %c8_28 = arith.constant 8 : index
    %c0_29 = arith.constant 0 : index
    %34 = vector.load %arg7[%c8_28, %c0_29] : memref<152x32xbf16, #tpu.memory_space<vmem>>, vector<8x32xbf16>
    %c16 = arith.constant 16 : index
    %c0_30 = arith.constant 0 : index
    %35 = vector.load %arg7[%c16, %c0_30] : memref<152x32xbf16, #tpu.memory_space<vmem>>, vector<8x32xbf16>
    %c24 = arith.constant 24 : index
    %c0_31 = arith.constant 0 : index
    %36 = vector.load %arg7[%c24, %c0_31] : memref<152x32xbf16, #tpu.memory_space<vmem>>, vector<8x32xbf16>
    %c40_32 = arith.constant 40 : index
    %c0_33 = arith.constant 0 : index
    %37 = vector.load %arg7[%c40_32, %c0_33] : memref<152x32xbf16, #tpu.memory_space<vmem>>, vector<8x32xbf16>
    %c48_34 = arith.constant 48 : index
    %c0_35 = arith.constant 0 : index
    %38 = vector.load %arg7[%c48_34, %c0_35] : memref<152x32xbf16, #tpu.memory_space<vmem>>, vector<8x32xbf16>
    %c56 = arith.constant 56 : index
    %c0_36 = arith.constant 0 : index
    %39 = vector.load %arg7[%c56, %c0_36] : memref<152x32xbf16, #tpu.memory_space<vmem>>, vector<8x32xbf16>
    %c64_37 = arith.constant 64 : index
    %c0_38 = arith.constant 0 : index
    %40 = vector.load %arg7[%c64_37, %c0_38] : memref<152x32xbf16, #tpu.memory_space<vmem>>, vector<8x32xbf16>
    %c80 = arith.constant 80 : index
    %c0_39 = arith.constant 0 : index
    %41 = vector.load %arg7[%c80, %c0_39] : memref<152x32xbf16, #tpu.memory_space<vmem>>, vector<8x32xbf16>
    %c88 = arith.constant 88 : index
    %c0_40 = arith.constant 0 : index
    %42 = vector.load %arg7[%c88, %c0_40] : memref<152x32xbf16, #tpu.memory_space<vmem>>, vector<8x32xbf16>
    %c96_41 = arith.constant 96 : index
    %c0_42 = arith.constant 0 : index
    %43 = vector.load %arg7[%c96_41, %c0_42] : memref<152x32xbf16, #tpu.memory_space<vmem>>, vector<8x32xbf16>
    %c104 = arith.constant 104 : index
    %c0_43 = arith.constant 0 : index
    %44 = vector.load %arg7[%c104, %c0_43] : memref<152x32xbf16, #tpu.memory_space<vmem>>, vector<8x32xbf16>
    %c120 = arith.constant 120 : index
    %c0_44 = arith.constant 0 : index
    %45 = vector.load %arg7[%c120, %c0_44] : memref<152x32xbf16, #tpu.memory_space<vmem>>, vector<8x32xbf16>
    %c128_45 = arith.constant 128 : index
    %c0_46 = arith.constant 0 : index
    %46 = vector.load %arg7[%c128_45, %c0_46] : memref<152x32xbf16, #tpu.memory_space<vmem>>, vector<8x32xbf16>
    %c136 = arith.constant 136 : index
    %c0_47 = arith.constant 0 : index
    %47 = vector.load %arg7[%c136, %c0_47] : memref<152x32xbf16, #tpu.memory_space<vmem>>, vector<8x32xbf16>
    %c144 = arith.constant 144 : index
    %c0_48 = arith.constant 0 : index
    %48 = vector.load %arg7[%c144, %c0_48] : memref<152x32xbf16, #tpu.memory_space<vmem>>, vector<8x32xbf16>
    %49 = tpu.concatenate %33, %34, %35, %36, %37, %38, %39, %40, %41, %42, %43, %44, %45, %46, %47, %48 in 1 : vector<8x32xbf16>, vector<8x32xbf16>, vector<8x32xbf16>, vector<8x32xbf16>, vector<8x32xbf16>, vector<8x32xbf16>, vector<8x32xbf16>, vector<8x32xbf16>, vector<8x32xbf16>, vector<8x32xbf16>, vector<8x32xbf16>, vector<8x32xbf16>, vector<8x32xbf16>, vector<8x32xbf16>, vector<8x32xbf16>, vector<8x32xbf16> -> vector<8x512xbf16>
    %cst_49 = arith.constant dense<0.000000e+00> : vector<8x32xf32>
    %50 = tpu.matmul %49, %32, %cst_49 {dimension_numbers = #tpu.dot_dimension_numbers<[1], [0], [0], [1], [0, 0, 1, 1], [], []>} : vector<8x512xbf16>, vector<512x32xbf16>, vector<8x32xf32> -> vector<8x32xf32>
    %c2 = arith.constant 2 : index
    %c0_50 = arith.constant 0 : index
    %51 = vector.load %arg4[%c2, %c0_50] : memref<5x32xf32, #tpu.memory_space<vmem>>, vector<1x32xf32>
    %52 = vector.broadcast %51 : vector<1x32xf32> to vector<8x32xf32>
    %53 = arith.addf %50, %52 : vector<8x32xf32>
    %cst_51 = arith.constant 0.000000e+00 : f32
    %54 = vector.broadcast %cst_51 : f32 to vector<8x32xf32>
    %55 = arith.maximumf %53, %54 : vector<8x32xf32>
    %c704 = arith.constant 704 : index
    %c0_52 = arith.constant 0 : index
    %56 = vector.load %arg3[%c704, %c0_52] : memref<768x32xbf16, #tpu.memory_space<vmem>>, vector<32x32xbf16>
    %c736 = arith.constant 736 : index
    %c0_53 = arith.constant 0 : index
    %57 = vector.load %arg3[%c736, %c0_53] : memref<768x32xbf16, #tpu.memory_space<vmem>>, vector<32x32xbf16>
    %c0_54 = arith.constant 0 : index
    %c0_55 = arith.constant 0 : index
    %58 = vector.load %arg2[%c0_54, %c0_55] : memref<8x32xf32, #tpu.memory_space<vmem>>, vector<8x32xf32>
    %59 = arith.addf %55, %58 : vector<8x32xf32>
    %60 = arith.truncf %59 : vector<8x32xf32> to vector<8x32xbf16>
    %cst_56 = arith.constant dense<0.000000e+00> : vector<8x32xf32>
    %61 = tpu.matmul %60, %56, %cst_56 {dimension_numbers = #tpu.dot_dimension_numbers<[1], [0], [0], [1], [0, 0, 1, 1], [], []>} : vector<8x32xbf16>, vector<32x32xbf16>, vector<8x32xf32> -> vector<8x32xf32>
    %c3 = arith.constant 3 : index
    %c0_57 = arith.constant 0 : index
    %62 = vector.load %arg4[%c3, %c0_57] : memref<5x32xf32, #tpu.memory_space<vmem>>, vector<1x32xf32>
    %63 = vector.broadcast %62 : vector<1x32xf32> to vector<8x32xf32>
    %64 = arith.addf %61, %63 : vector<8x32xf32>
    %cst_58 = arith.constant 0.000000e+00 : f32
    %65 = vector.broadcast %cst_58 : f32 to vector<8x32xf32>
    %66 = arith.maximumf %64, %65 : vector<8x32xf32>
    %67 = arith.truncf %66 : vector<8x32xf32> to vector<8x32xbf16>
    %cst_59 = arith.constant dense<0.000000e+00> : vector<8x32xf32>
    %68 = tpu.matmul %67, %57, %cst_59 {dimension_numbers = #tpu.dot_dimension_numbers<[1], [0], [0], [1], [0, 0, 1, 1], [], []>} : vector<8x32xbf16>, vector<32x32xbf16>, vector<8x32xf32> -> vector<8x32xf32>
    %c4 = arith.constant 4 : index
    %c0_60 = arith.constant 0 : index
    %69 = vector.load %arg4[%c4, %c0_60] : memref<5x32xf32, #tpu.memory_space<vmem>>, vector<1x32xf32>
    %70 = vector.broadcast %69 : vector<1x32xf32> to vector<8x32xf32>
    %71 = arith.addf %68, %70 : vector<8x32xf32>
    %72 = vector.extract_strided_slice %71 {offsets = [0, 0], sizes = [8, 2], strides = [1, 1]} : vector<8x32xf32> to vector<8x2xf32>
    %c0_61 = arith.constant 0 : index
    %c0_62 = arith.constant 0 : index
    %73 = vector.load %arg5[%c0_61, %c0_62] : memref<8x2xf32, #tpu.memory_space<vmem>>, vector<8x2xf32>
    tpu.vector_store %arg5[%c0_61, %c0_62], %72 {strides = array<i32>} : memref<8x2xf32, #tpu.memory_space<vmem>>, vector<8x2xf32>,
    return
  }
  func.func @transform_0(%arg0: i32) -> (i32, i32) {
    %c0_i32 = arith.constant 0 : i32
    %c0_i32_0 = arith.constant 0 : i32
    return %arg0, %c0_i32 : i32, i32
  }
  func.func @transform_1(%arg0: i32) -> (i32, i32) {
    %c0_i32 = arith.constant 0 : i32
    %c0_i32_0 = arith.constant 0 : i32
    return %arg0, %c0_i32 : i32, i32
  }
  func.func @transform_2(%arg0: i32) -> (i32, i32) {
    %c0_i32 = arith.constant 0 : i32
    %c0_i32_0 = arith.constant 0 : i32
    %c0_i32_1 = arith.constant 0 : i32
    return %c0_i32, %c0_i32_0 : i32, i32
  }
  func.func @transform_3(%arg0: i32) -> (i32, i32) {
    %c0_i32 = arith.constant 0 : i32
    %c0_i32_0 = arith.constant 0 : i32
    %c0_i32_1 = arith.constant 0 : i32
    return %c0_i32, %c0_i32_0 : i32, i32
  }
  func.func @transform_4(%arg0: i32) -> (i32, i32) {
    %c0_i32 = arith.constant 0 : i32
    %c0_i32_0 = arith.constant 0 : i32
    return %arg0, %c0_i32 : i32, i32
  }
}

</mosaic_0001>

<llo_original>
// kernel: cnnbase_forward.1
$region0: #{cnnbase_forward.1}
  #allocation0 [shape = 'u32[]', space=smem, size = 0x4, offset = 0x4, fixed_abs, tag = 'smem constant byte address 0x4 - core index']
  #allocation1 [shape = 'u32[72,128]{1,0:T(1,128)}', space=vmem, size = 0x9000, scoped, tag = 'internal scratch']
  #allocation2 [shape = 'bf16[200,32]{1,0:T(8,128)(2,1)}', space=vmem, size = 0xc800, scoped, tag = 'scratch operand']
  #allocation3 [shape = 'bf16[152,32]{1,0:T(8,128)(2,1)}', space=vmem, size = 0x9800, scoped, tag = 'scratch operand']
  %s0 = inlined_call_operand.vmem [shape: bf16[400,64], index: 0, kind: input, shape index: {}]
  %s1 = inlined_call_operand.vmem [shape: f32[16,32], index: 1, kind: input, shape index: {}]
  %s2 = inlined_call_operand.vmem [shape: bf16[768,32], index: 2, kind: input, shape index: {}]
  %s3 = inlined_call_operand.vmem [shape: f32[5,32], index: 3, kind: input, shape index: {}]
  %s4 = inlined_call_operand.vmem [shape: f32[16,2], index: 4, kind: output, shape index: {}]
  %s5 = sld [smem:[#allocation0]]
  $region49: #{cnnbase_forward.1} parent=0
    _
  %s7 = ssub.s32 1, %s5
  %s8 = scalar_select 0, %s7, %s5
  loop: start=0, step=1, limit=4
  $region2: #{cnnbase_forward.1} parent=0 // loop_pre_header
    _
  $region3: #{cnnbase_forward.1} parent=0 // loop_header
    %s10 = sphi 0, %s14
    %p11 = scmp.ge.s32.totalorder %s10, 4
    %s20 = sphi 0, %s22
    %s23 = sphi 0, %s20
    %s24 = sphi 0, %s23
    %s40 = sphi 0, %s24
    %s46 = sphi 0, %s48
    %s49 = sphi 0, %s46
    %s50 = sphi 0, %s49
    %s66 = sphi 0, %s50
    %s70 = sphi 0, %s70
    %s72 = sphi 0, %s70
    %s73 = sphi 0, %s72
    %s87 = sphi 0, %s73
    %s91 = sphi 0, %s91
    %s93 = sphi 0, %s91
    %s94 = sphi 0, %s93
    %s108 = sphi 0, %s94
    %s114 = sphi 0, %s116
    %s117 = sphi 0, %s114
    %s118 = sphi 0, %s117
    %s134 = sphi 0, %s118
  $region4: #{cnnbase_forward.1} parent=0 // loop_header_branch
    %13 = sbr.rel (%p11) target = $region8
  $region5: #{cnnbase_forward.1} parent=0 // loop_body
    %s15 = ssub.s32 %s10, 1
    %s16 = ssub.s32 %s10, 2
    %s17 = sadd.s32 %s10, 1
    %s18 = ssub.s32 %s10, %s17
    %p19 = scmp.eq.s32.totalorder %s18, 0
    %s21 = sadd.s32 %s20, 1
    %s22 = scalar_select %p19, %s20, %s21
    %p25 = pneg %p19
    %p26 = scmp.eq.s32.totalorder %s10, 1
    %p27 = por %p25, %p26
    %p28 = scmp.ne.s32.totalorder %s20, %s23
    %p29 = scmp.eq.s32.totalorder %s10, 0
    %p30 = por %p28, %p29
    %p31 = scmp.ne.s32.totalorder %s20, %s23
    %p32 = scmp.eq.s32.totalorder %s15, 1
    %p33 = por %p31, %p32
    %p34 = scmp.ne.s32.totalorder %s23, %s24
    %p35 = scmp.eq.s32.totalorder %s15, 0
    %p36 = por %p34, %p35
    %p37 = scmp.ne.s32.totalorder %s23, %s24
    %p38 = scmp.eq.s32.totalorder %s16, 1
    %p39 = por %p37, %p38
    %p41 = scmp.ne.s32.totalorder %s24, %s40
    %p42 = scmp.eq.s32.totalorder %s16, 0
    %p43 = por %p41, %p42
    %s44 = ssub.s32 %s10, %s17
    %p45 = scmp.eq.s32.totalorder %s44, 0
    %s47 = sadd.s32 %s46, 1
    %s48 = scalar_select %p45, %s46, %s47
    %p51 = pneg %p45
    %p52 = scmp.eq.s32.totalorder %s10, 1
    %p53 = por %p51, %p52
    %p54 = scmp.ne.s32.totalorder %s46, %s49
    %p55 = scmp.eq.s32.totalorder %s10, 0
    %p56 = por %p54, %p55
    %p57 = scmp.ne.s32.totalorder %s46, %s49
    %p58 = scmp.eq.s32.totalorder %s15, 1
    %p59 = por %p57, %p58
    %p60 = scmp.ne.s32.totalorder %s49, %s50
    %p61 = scmp.eq.s32.totalorder %s15, 0
    %p62 = por %p60, %p61
    %p63 = scmp.ne.s32.totalorder %s49, %s50
    %p64 = scmp.eq.s32.totalorder %s16, 1
    %p65 = por %p63, %p64
    %p67 = scmp.ne.s32.totalorder %s50, %s66
    %p68 = scmp.eq.s32.totalorder %s16, 0
    %p69 = por %p67, %p68
    %s71 = sadd.s32 %s70, 1
    %p74 = scmp.eq.s32.totalorder %s10, 1
    %p75 = scmp.ne.s32.totalorder %s70, %s72
    %p76 = scmp.eq.s32.totalorder %s10, 0
    %p77 = por %p75, %p76
    %p78 = scmp.ne.s32.totalorder %s70, %s72
    %p79 = scmp.eq.s32.totalorder %s15, 1
    %p80 = por %p78, %p79
    %p81 = scmp.ne.s32.totalorder %s72, %s73
    %p82 = scmp.eq.s32.totalorder %s15, 0
    %p83 = por %p81, %p82
    %p84 = scmp.ne.s32.totalorder %s72, %s73
    %p85 = scmp.eq.s32.totalorder %s16, 1
    %p86 = por %p84, %p85
    %p88 = scmp.ne.s32.totalorder %s73, %s87
    %p89 = scmp.eq.s32.totalorder %s16, 0
    %p90 = por %p88, %p89
    %s92 = sadd.s32 %s91, 1
    %p95 = scmp.eq.s32.totalorder %s10, 1
    %p96 = scmp.ne.s32.totalorder %s91, %s93
    %p97 = scmp.eq.s32.totalorder %s10, 0
    %p98 = por %p96, %p97
    %p99 = scmp.ne.s32.totalorder %s91, %s93
    %p100 = scmp.eq.s32.totalorder %s15, 1
    %p101 = por %p99, %p100
    %p102 = scmp.ne.s32.totalorder %s93, %s94
    %p103 = scmp.eq.s32.totalorder %s15, 0
    %p104 = por %p102, %p103
    %p105 = scmp.ne.s32.totalorder %s93, %s94
    %p106 = scmp.eq.s32.totalorder %s16, 1
    %p107 = por %p105, %p106
    %p109 = scmp.ne.s32.totalorder %s94, %s108
    %p110 = scmp.eq.s32.totalorder %s16, 0
    %p111 = por %p109, %p110
    %s112 = ssub.s32 %s10, %s17
    %p113 = scmp.eq.s32.totalorder %s112, 0
    %s115 = sadd.s32 %s114, 1
    %s116 = scalar_select %p113, %s114, %s115
    %p119 = pneg %p113
    %p120 = scmp.eq.s32.totalorder %s10, 1
    %p121 = por %p119, %p120
    %p122 = scmp.ne.s32.totalorder %s114, %s117
    %p123 = scmp.eq.s32.totalorder %s10, 0
    %p124 = por %p122, %p123
    %p125 = scmp.ne.s32.totalorder %s114, %s117
    %p126 = scmp.eq.s32.totalorder %s15, 1
    %p127 = por %p125, %p126
    %p128 = scmp.ne.s32.totalorder %s117, %s118
    %p129 = scmp.eq.s32.totalorder %s15, 0
    %p130 = por %p128, %p129
    %p131 = scmp.ne.s32.totalorder %s117, %s118
    %p132 = scmp.eq.s32.totalorder %s16, 1
    %p133 = por %p131, %p132
    %p135 = scmp.ne.s32.totalorder %s118, %s134
    %p136 = scmp.eq.s32.totalorder %s16, 0
    %p137 = por %p135, %p136
    %p138 = scmp.le.s32.totalorder 1, %s10
    %p139 = scmp.lt.s32.totalorder %s10, 3
    %p140 = pnand %p138, %p139
    %p141 = pneg %p140
    // Predicated region
    $region9: #{cnnbase_forward.1} parent=5 // pred_check
      _
    $region10: #{cnnbase_forward.1} parent=5 // pred_check_branch
      %143 = sbr.rel (%p140) target = $region12
    $region11: #{cnnbase_forward.1} parent=5 // pred_region
      %s144 = ssub.s32 %s10, 1
      // Predicated region
      $region13: #{cnnbase_forward.1} parent=11 // pred_check
        %p145 = pneg %p83
      $region14: #{cnnbase_forward.1} parent=11 // pred_check_branch
        %147 = sbr.rel (%p145) target = $region16
      $region15: #{cnnbase_forward.1} parent=11 // pred_region
        _
      $region16: #{cnnbase_forward.1} parent=11 // pred_fallthru
        _
      // Predicated region
      $region17: #{cnnbase_forward.1} parent=11 // pred_check
        %p148 = pneg %p104
      $region18: #{cnnbase_forward.1} parent=11 // pred_check_branch
        %150 = sbr.rel (%p148) target = $region20
      $region19: #{cnnbase_forward.1} parent=11 // pred_region
        _
      $region20: #{cnnbase_forward.1} parent=11 // pred_fallthru
        _
    $region12: #{cnnbase_forward.1} parent=5 // pred_fallthru
      _
    %p151 = scmp.lt.s32.totalorder %s10, 2
    // Predicated region
    $region21: #{cnnbase_forward.1} parent=5 // pred_check
      %p152 = pneg %p151
    $region22: #{cnnbase_forward.1} parent=5 // pred_check_branch
      %154 = sbr.rel (%p152) target = $region24
    $region23: #{cnnbase_forward.1} parent=5 // pred_region
      // Predicated region
      $region25: #{cnnbase_forward.1} parent=23 // pred_check
        %p155 = pneg %p30
      $region26: #{cnnbase_forward.1} parent=23 // pred_check_branch
        %157 = sbr.rel (%p155) target = $region28
      $region27: #{cnnbase_forward.1} parent=23 // pred_region
        %s158 = smul.u32 25, %s10
        %p159 = scmp.lt.s32.totalorder %s158, 49
        %s160 = scalar_select %p159, %s158, 49
        %s161 = smul.addr %s160, 4
        %s162 = scalar_lea.vmem %s0, %s161
        %s163 = smul.u32 25, %s10
      $region28: #{cnnbase_forward.1} parent=23 // pred_fallthru
        _
      // Predicated region
      $region29: #{cnnbase_forward.1} parent=23 // pred_check
        %p164 = pneg %p56
      $region30: #{cnnbase_forward.1} parent=23 // pred_check_branch
        %166 = sbr.rel (%p164) target = $region32
      $region31: #{cnnbase_forward.1} parent=23 // pred_region
        %p167 = scmp.lt.s32.totalorder %s10, 1
        %s168 = scalar_select %p167, %s10, 1
        %s169 = smul.addr %s168, 8
        %s170 = scalar_lea.vmem %s1, %s169
      $region32: #{cnnbase_forward.1} parent=23 // pred_fallthru
        _
    $region24: #{cnnbase_forward.1} parent=5 // pred_fallthru
      _
    %p171 = scmp.le.s32.totalorder 1, %s10
    %p172 = scmp.lt.s32.totalorder %s10, 3
    %p173 = pnand %p171, %p172
    %p174 = pneg %p173
    // Predicated region
    $region33: #{cnnbase_forward.1} parent=5 // pred_check
      _
    $region34: #{cnnbase_forward.1} parent=5 // pred_check_branch
      %176 = sbr.rel (%p173) target = $region36
    $region35: #{cnnbase_forward.1} parent=5 // pred_region
      %s177 = ssub.s32 %s10, 1
      %s178 = smul.u32 25, %s15
      %p179 = scmp.lt.s32.totalorder %s178, 49
      %s180 = scalar_select %p179, %s178, 49
      %s181 = smul.addr %s180, 4
      %s182 = scalar_lea.vmem %s0, %s181
      %p183 = pneg %p36
      %p184 = pneg %p33
      %p185 = scmp.lt.s32.totalorder %s15, 1
      %s186 = scalar_select %p185, %s15, 1
      %s187 = smul.addr %s186, 8
      %s188 = scalar_lea.vmem %s1, %s187
      %p189 = pneg %p62
      %p190 = pneg %p59
      %p191 = pneg %p83
      %p192 = pneg %p80
      %p193 = pneg %p104
      %p194 = pneg %p101
      %p195 = pneg %p130
      %p196 = pneg %p127
      %p197 = scmp.lt.s32.totalorder %s15, 1
      %s198 = scalar_select %p197, %s15, 1
      %s199 = smul.addr %s198, 8
      %s200 = scalar_lea.vmem %s4, %s199
      %s201 = smul.u32 25, %s15
      %p202 = scmp.lt.s32.totalorder %s201, 49
      %s203 = scalar_select %p202, %s201, 49
      %s204 = smul.addr %s203, 4
      %s205 = scalar_lea.vmem %s0, %s204
      %s206 = smul.u32 25, %s15
      %p207 = scmp.lt.s32.totalorder %s15, 1
      %s208 = scalar_select %p207, %s15, 1
      %s209 = smul.addr %s208, 8
      %s210 = scalar_lea.vmem %s1, %s209
      %p211 = scmp.lt.s32.totalorder %s15, 1
      %s212 = scalar_select %p211, %s15, 1
      %s213 = smul.addr %s212, 8
      %s214 = scalar_lea.vmem %s4, %s213
      %v216 = vld [vmem:[%s2] sm:$0xf]
      %v217 = vld [vmem:[%s2 + $0x4] sm:$0xf]
      %v218 = vld [vmem:[%s2 + $0x8] sm:$0xf]
      %v219 = vld [vmem:[%s2 + $0xc] sm:$0xf]
      %v220 = vld [vmem:[%s2 + $0x10] sm:$0xf]
      %v221 = vld [vmem:[%s2 + $0x14] sm:$0xf]
      %v222 = vld [vmem:[%s2 + $0x18] sm:$0xf]
      %v223 = vld [vmem:[%s2 + $0x1c] sm:$0xf]
      %v224 = vld [vmem:[%s205] sm:$0xf]
      %v225 = vld [vmem:[%s205 + $0x4] sm:$0xf]
      %v226 = vld [vmem:[%s205 + $0x8] sm:$0xf]
      %v227 = vld [vmem:[%s205 + $0xc] sm:$0xf]
      %v228 = vld [vmem:[%s205 + $0x10] sm:$0xf]
      %v229 = vld [vmem:[%s205 + $0x14] sm:$0xf]
      %v230 = vld [vmem:[%s205 + $0x18] sm:$0xf]
      %v231 = vld [vmem:[%s205 + $0x1c] sm:$0xf]
      %v232 = vld [vmem:[%s205 + $0x20] sm:$0xf]
      %v233 = vld [vmem:[%s205 + $0x24] sm:$0xf]
      %v234 = vld [vmem:[%s205 + $0x28] sm:$0xf]
      %v235 = vld [vmem:[%s205 + $0x2c] sm:$0xf]
      %v236 = vld [vmem:[%s205 + $0x30] sm:$0xf]
      %v237 = vld [vmem:[%s205 + $0x34] sm:$0xf]
      %v238 = vld [vmem:[%s205 + $0x38] sm:$0xf]
      %v239 = vld [vmem:[%s205 + $0x3c] sm:$0xf]
      %v240 = vld [vmem:[%s205 + $0x40] sm:$0xf]
      %v241 = vld [vmem:[%s205 + $0x44] sm:$0xf]
      %v242 = vld [vmem:[%s205 + $0x48] sm:$0xf]
      %v243 = vld [vmem:[%s205 + $0x4c] sm:$0xf]
      %v244 = vld [vmem:[%s205 + $0x50] sm:$0xf]
      %v245 = vld [vmem:[%s205 + $0x54] sm:$0xf]
      %v246 = vld [vmem:[%s205 + $0x58] sm:$0xf]
      %v247 = vld [vmem:[%s205 + $0x5c] sm:$0xf]
      %v248 = vld [vmem:[%s205 + $0x60] sm:$0xf]
      %v249 = vld [vmem:[%s3] sm:$0x1]
      %v250 = vperm.slane %v249, 0
      %v276 = vunpack.c.l.b16 %v224
      %v277 = vunpack.c.l.b16 %v225
      %v278 = vunpack.c.l.b16 %v226
      %v279 = vunpack.c.l.b16 %v227
      %v280 = vunpack.c.l.b16 %v228
      %v281 = vunpack.c.l.b16 %v229
      %v282 = vunpack.c.l.b16 %v230
      %v283 = vunpack.c.l.b16 %v231
      %v284 = vunpack.c.l.b16 %v232
      %v285 = vunpack.c.l.b16 %v233
      %v286 = vunpack.c.l.b16 %v234
      %v287 = vunpack.c.l.b16 %v235
      %v288 = vunpack.c.l.b16 %v236
      %v289 = vunpack.c.l.b16 %v237
      %v290 = vunpack.c.l.b16 %v238
      %v291 = vunpack.c.l.b16 %v239
      %v292 = vunpack.c.l.b16 %v240
      %v293 = vunpack.c.l.b16 %v241
      %v294 = vunpack.c.l.b16 %v242
      %v295 = vunpack.c.l.b16 %v243
      %v296 = vunpack.c.l.b16 %v244
      %v297 = vunpack.c.l.b16 %v245
      %v298 = vunpack.c.l.b16 %v246
      %v299 = vunpack.c.l.b16 %v247
      %v300 = vunpack.c.l.b16 %v248
      %v301 = vpack.c.b16 %v277, %v276
      %v302 = vpack.c.b16 %v279, %v278
      %v303 = vpack.c.b16 %v281, %v280
      %v304 = vpack.c.b16 %v283, %v282
      %v305 = vpack.c.b16 %v285, %v284
      %v306 = vpack.c.b16 %v287, %v286
      %v307 = vpack.c.b16 %v289, %v288
      %v308 = vpack.c.b16 %v291, %v290
      %v309 = vpack.c.b16 %v293, %v292
      %v310 = vpack.c.b16 %v295, %v294
      %v311 = vpack.c.b16 %v297, %v296
      %v312 = vpack.c.b16 %v299, %v298
      %v313 = vpack.c.b16 %v300, %v300
      %v322 = vunpack.c.l.b16 %v216
      %v323 = vunpack.c.l.b16 %v217
      %v324 = vunpack.c.l.b16 %v218
      %v325 = vunpack.c.l.b16 %v219
      %v326 = vunpack.c.l.b16 %v220
      %v327 = vunpack.c.l.b16 %v221
      %v328 = vunpack.c.l.b16 %v222
      %v329 = vunpack.c.l.b16 %v223
      %v330 = vpack.c.b16 %v323, %v322
      %v331 = vpack.c.b16 %v325, %v324
      %v332 = vpack.c.b16 %v327, %v326
      %v333 = vpack.c.b16 %v329, %v328
      %vm338 = vcmask 523264
      %v340 = vsel %vm338, %v301, 0
      %v343 = vsel %vm338, %v302, 0
      %v346 = vsel %vm338, %v303, 0
      %v349 = vsel %vm338, %v304, 0
      %v352 = vsel %vm338, %v305, 0
      %v355 = vsel %vm338, %v306, 0
      %v358 = vsel %vm338, %v307, 0
      %v361 = vsel %vm338, %v308, 0
      %v364 = vsel %vm338, %v309, 0
      %v367 = vsel %vm338, %v310, 0
      %v370 = vsel %vm338, %v311, 0
      %v373 = vsel %vm338, %v312, 0
      %v376 = vsel %vm338, %v313, 0
      %378 = vmatpush.bf16.msra.mxu0 0
      %379 = vmatpush.bf16.msra.mxu0 0
      %380 = vmatpush.bf16.msra.mxu0 0
      %381 = vmatpush.bf16.msra.mxu0 0
      %382 = vmatpush.bf16.msra.mxu0 %v333
      %383 = vmatpush.bf16.msra.mxu0 %v332
      %384 = vmatpush.bf16.msra.mxu0 %v331
      %385 = vmatpush.bf16.msra.mxu0 %v330
      %386 = vmatmul.bf16.gmra.mxu0 %v340
      %v387 = vpop.f32.mrf.mxu0
      %v388 = vadd.f32 %v250, %v387
      %v389 = vpop.f32.mrf.mxu0
      %v390 = vadd.f32 %v250, %v389
      %391 = vmatmul.bf16.gmra.mxu0 %v343
      %v392 = vpop.f32.mrf.mxu0
      %v393 = vadd.f32 %v250, %v392
      %v394 = vpop.f32.mrf.mxu0
      %v395 = vadd.f32 %v250, %v394
      %396 = vmatmul.bf16.gmra.mxu0 %v346
      %v397 = vpop.f32.mrf.mxu0
      %v398 = vadd.f32 %v250, %v397
      %v399 = vpop.f32.mrf.mxu0
      %v400 = vadd.f32 %v250, %v399
      %401 = vmatmul.bf16.gmra.mxu0 %v349
      %v402 = vpop.f32.mrf.mxu0
      %v403 = vadd.f32 %v250, %v402
      %v404 = vpop.f32.mrf.mxu0
      %v405 = vadd.f32 %v250, %v404
      %406 = vmatmul.bf16.gmra.mxu0 %v352
      %v407 = vpop.f32.mrf.mxu0
      %v408 = vadd.f32 %v250, %v407
      %v409 = vpop.f32.mrf.mxu0
      %v410 = vadd.f32 %v250, %v409
      %411 = vmatmul.bf16.gmra.mxu0 %v355
      %v412 = vpop.f32.mrf.mxu0
      %v413 = vadd.f32 %v250, %v412
      %v414 = vpop.f32.mrf.mxu0
      %v415 = vadd.f32 %v250, %v414
      %416 = vmatmul.bf16.gmra.mxu0 %v358
      %v417 = vpop.f32.mrf.mxu0
      %v418 = vadd.f32 %v250, %v417
      %v419 = vpop.f32.mrf.mxu0
      %v420 = vadd.f32 %v250, %v419
      %421 = vmatmul.bf16.gmra.mxu0 %v361
      %v422 = vpop.f32.mrf.mxu0
      %v423 = vadd.f32 %v250, %v422
      %v424 = vpop.f32.mrf.mxu0
      %v425 = vadd.f32 %v250, %v424
      %426 = vmatmul.bf16.gmra.mxu0 %v364
      %v427 = vpop.f32.mrf.mxu0
      %v428 = vadd.f32 %v250, %v427
      %v429 = vpop.f32.mrf.mxu0
      %v430 = vadd.f32 %v250, %v429
      %431 = vmatmul.bf16.gmra.mxu0 %v367
      %v432 = vpop.f32.mrf.mxu0
      %v433 = vadd.f32 %v250, %v432
      %v434 = vpop.f32.mrf.mxu0
      %v435 = vadd.f32 %v250, %v434
      %436 = vmatmul.bf16.gmra.mxu0 %v370
      %v437 = vpop.f32.mrf.mxu0
      %v438 = vadd.f32 %v250, %v437
      %v439 = vpop.f32.mrf.mxu0
      %v440 = vadd.f32 %v250, %v439
      %441 = vmatmul.bf16.gmra.mxu0 %v373
      %v442 = vpop.f32.mrf.mxu0
      %v443 = vadd.f32 %v250, %v442
      %v444 = vpop.f32.mrf.mxu0
      %v445 = vadd.f32 %v250, %v444
      %446 = vmatmul.bf16.gmra.mxu0 %v376
      %v447 = vpop.f32.mrf.mxu0
      %v448 = vadd.f32 %v250, %v447
      %v449 = vpop.f32.mrf.mxu0
      %450 = vdwg.mxu0
      %v451 = vmax.f32 %v388, 0.0
      %v452 = vmax.f32 %v390, 0.0
      %v453 = vmax.f32 %v393, 0.0
      %v454 = vmax.f32 %v395, 0.0
      %v455 = vmax.f32 %v398, 0.0
      %v456 = vmax.f32 %v400, 0.0
      %v457 = vmax.f32 %v403, 0.0
      %v458 = vmax.f32 %v405, 0.0
      %v459 = vmax.f32 %v408, 0.0
      %v460 = vmax.f32 %v410, 0.0
      %v461 = vmax.f32 %v413, 0.0
      %v462 = vmax.f32 %v415, 0.0
      %v463 = vmax.f32 %v418, 0.0
      %v464 = vmax.f32 %v420, 0.0
      %v465 = vmax.f32 %v423, 0.0
      %v466 = vmax.f32 %v425, 0.0
      %v467 = vmax.f32 %v428, 0.0
      %v468 = vmax.f32 %v430, 0.0
      %v469 = vmax.f32 %v433, 0.0
      %v470 = vmax.f32 %v435, 0.0
      %v471 = vmax.f32 %v438, 0.0
      %v472 = vmax.f32 %v440, 0.0
      %v473 = vmax.f32 %v443, 0.0
      %v474 = vmax.f32 %v445, 0.0
      %v475 = vmax.f32 %v448, 0.0
      %v476 = vpack.c.bf16 %v451, %v451
      %v477 = vpack.c.bf16 %v452, %v452
      %v478 = vpack.c.bf16 %v453, %v453
      %v479 = vpack.c.bf16 %v454, %v454
      %v480 = vpack.c.bf16 %v455, %v455
      %v481 = vpack.c.bf16 %v456, %v456
      %v482 = vpack.c.bf16 %v457, %v457
      %v483 = vpack.c.bf16 %v458, %v458
      %v484 = vpack.c.bf16 %v459, %v459
      %v485 = vpack.c.bf16 %v460, %v460
      %v486 = vpack.c.bf16 %v461, %v461
      %v487 = vpack.c.bf16 %v462, %v462
      %v488 = vpack.c.bf16 %v463, %v463
      %v489 = vpack.c.bf16 %v464, %v464
      %v490 = vpack.c.bf16 %v465, %v465
      %v491 = vpack.c.bf16 %v466, %v466
      %v492 = vpack.c.bf16 %v467, %v467
      %v493 = vpack.c.bf16 %v468, %v468
      %v494 = vpack.c.bf16 %v469, %v469
      %v495 = vpack.c.bf16 %v470, %v470
      %v496 = vpack.c.bf16 %v471, %v471
      %v497 = vpack.c.bf16 %v472, %v472
      %v498 = vpack.c.bf16 %v473, %v473
      %v499 = vpack.c.bf16 %v474, %v474
      %v500 = vpack.c.bf16 %v475, %v475
      %vm501 = vcmask 257024
      %502 = vst.msk [vmem:[#allocation2] sm:$0xf] %vm501, %v476
      %503 = vst.msk [vmem:[#allocation2 + $0x4] sm:$0xf] %vm501, %v477
      %504 = vst.msk [vmem:[#allocation2 + $0x8] sm:$0xf] %vm501, %v478
      %505 = vst.msk [vmem:[#allocation2 + $0xc] sm:$0xf] %vm501, %v479
      %506 = vst.msk [vmem:[#allocation2 + $0x10] sm:$0xf] %vm501, %v480
      %507 = vst.msk [vmem:[#allocation2 + $0x14] sm:$0xf] %vm501, %v481
      %508 = vst.msk [vmem:[#allocation2 + $0x18] sm:$0xf] %vm501, %v482
      %509 = vst.msk [vmem:[#allocation2 + $0x1c] sm:$0xf] %vm501, %v483
      %510 = vst.msk [vmem:[#allocation2 + $0x20] sm:$0xf] %vm501, %v484
      %511 = vst.msk [vmem:[#allocation2 + $0x24] sm:$0xf] %vm501, %v485
      %512 = vst.msk [vmem:[#allocation2 + $0x28] sm:$0xf] %vm501, %v486
      %513 = vst.msk [vmem:[#allocation2 + $0x2c] sm:$0xf] %vm501, %v487
      %514 = vst.msk [vmem:[#allocation2 + $0x30] sm:$0xf] %vm501, %v488
      %515 = vst.msk [vmem:[#allocation2 + $0x34] sm:$0xf] %vm501, %v489
      %516 = vst.msk [vmem:[#allocation2 + $0x38] sm:$0xf] %vm501, %v490
      %517 = vst.msk [vmem:[#allocation2 + $0x3c] sm:$0xf] %vm501, %v491
      %518 = vst.msk [vmem:[#allocation2 + $0x40] sm:$0xf] %vm501, %v492
      %519 = vst.msk [vmem:[#allocation2 + $0x44] sm:$0xf] %vm501, %v493
      %520 = vst.msk [vmem:[#allocation2 + $0x48] sm:$0xf] %vm501, %v494
      %521 = vst.msk [vmem:[#allocation2 + $0x4c] sm:$0xf] %vm501, %v495
      %522 = vst.msk [vmem:[#allocation2 + $0x50] sm:$0xf] %vm501, %v496
      %523 = vst.msk [vmem:[#allocation2 + $0x54] sm:$0xf] %vm501, %v497
      %524 = vst.msk [vmem:[#allocation2 + $0x58] sm:$0xf] %vm501, %v498
      %525 = vst.msk [vmem:[#allocation2 + $0x5c] sm:$0xf] %vm501, %v499
      %526 = vst.msk [vmem:[#allocation2 + $0x60] sm:$0xf] %vm501, %v500
      %v527 = vld [vmem:[#allocation2] sm:$0xf]
      %v528 = vld [vmem:[#allocation2 + $0x4] sm:$0xf]
      %v529 = vld [vmem:[#allocation2 + $0x8] sm:$0xf]
      %v530 = vld [vmem:[#allocation2 + $0xc] sm:$0xf]
      %v531 = vld [vmem:[#allocation2 + $0x10] sm:$0xf]
      %v532 = vld [vmem:[#allocation2 + $0x14] sm:$0xf]
      %v533 = vld [vmem:[#allocation2 + $0x18] sm:$0xf]
      %v534 = vld [vmem:[#allocation2 + $0x1c] sm:$0xf]
      %v535 = vld [vmem:[#allocation2 + $0x20] sm:$0xf]
      %v536 = vld [vmem:[#allocation2 + $0x24] sm:$0xf]
      %v537 = vld [vmem:[#allocation2 + $0x28] sm:$0xf]
      %v538 = vld [vmem:[#allocation2 + $0x2c] sm:$0xf]
      %v539 = vld [vmem:[#allocation2 + $0x30] sm:$0xf]
      %v540 = vld [vmem:[#allocation2 + $0x34] sm:$0xf]
      %v541 = vld [vmem:[#allocation2 + $0x38] sm:$0xf]
      %v542 = vld [vmem:[#allocation2 + $0x3c] sm:$0xf]
      %v543 = vld [vmem:[#allocation2 + $0x40] sm:$0xf]
      %v544 = vld [vmem:[#allocation2 + $0x44] sm:$0xf]
      %v545 = vld [vmem:[#allocation2 + $0x48] sm:$0xf]
      %v546 = vld [vmem:[%s2 + $0x20] sm:$0xf]
      %v547 = vld [vmem:[%s2 + $0x24] sm:$0xf]
      %v548 = vld [vmem:[%s2 + $0x28] sm:$0xf]
      %v549 = vld [vmem:[%s2 + $0x2c] sm:$0xf]
      %v550 = vld [vmem:[#allocation2 + $0x4c] sm:$0xf]
      %v551 = vld [vmem:[%s2 + $0x30] sm:$0xf]
      %v552 = vld [vmem:[%s2 + $0x34] sm:$0xf]
      %v553 = vld [vmem:[%s2 + $0x38] sm:$0xf]
      %v554 = vld [vmem:[%s2 + $0x3c] sm:$0xf]
      %v574 = vunpack.c.l.b16 %v528
      %v575 = vunpack.c.l.b16 %v529
      %v576 = vunpack.c.l.b16 %v530
      %v577 = vunpack.c.l.b16 %v531
      %v578 = vunpack.c.l.b16 %v532
      %v579 = vunpack.c.l.b16 %v533
      %v580 = vunpack.c.l.b16 %v534
      %v581 = vunpack.c.l.b16 %v535
      %v582 = vunpack.c.l.b16 %v536
      %v583 = vunpack.c.l.b16 %v537
      %v584 = vunpack.c.l.b16 %v538
      %v585 = vunpack.c.l.b16 %v539
      %v586 = vunpack.c.l.b16 %v540
      %v587 = vunpack.c.l.b16 %v541
      %v588 = vunpack.c.l.b16 %v542
      %v589 = vunpack.c.l.b16 %v543
      %v590 = vunpack.c.l.b16 %v544
      %v591 = vunpack.c.l.b16 %v545
      %v592 = vunpack.c.l.b16 %v550
      %v593 = vpack.c.b16 %v575, %v574
      %v594 = vpack.c.b16 %v577, %v576
      %v595 = vpack.c.b16 %v579, %v578
      %v596 = vpack.c.b16 %v581, %v580
      %v597 = vpack.c.b16 %v583, %v582
      %v598 = vpack.c.b16 %v585, %v584
      %v599 = vpack.c.b16 %v587, %v586
      %v600 = vpack.c.b16 %v589, %v588
      %v601 = vpack.c.b16 %v591, %v590
      %v602 = vpack.c.b16 %v592, %v592
      %v607 = vunpack.c.l.b16 %v551
      %v608 = vunpack.c.l.b16 %v552
      %v609 = vunpack.c.l.b16 %v553
      %v610 = vunpack.c.l.b16 %v554
      %v611 = vpack.c.b16 %v608, %v607
      %v612 = vpack.c.b16 %v610, %v609
      %vm615 = vcmask 261120
      %v617 = vsel %vm615, %v593, 0
      %v620 = vsel %vm615, %v594, 0
      %v623 = vsel %vm615, %v595, 0
      %v626 = vsel %vm615, %v596, 0
      %v629 = vsel %vm615, %v597, 0
      %v632 = vsel %vm615, %v598, 0
      %v635 = vsel %vm615, %v599, 0
      %v638 = vsel %vm615, %v600, 0
      %v641 = vsel %vm615, %v601, 0
      %v644 = vsel %vm615, %v602, 0
      %646 = vmatpush.bf16.msra.mxu0 0
      %647 = vmatpush.bf16.msra.mxu0 0
      %648 = vmatpush.bf16.msra.mxu0 0
      %649 = vmatpush.bf16.msra.mxu0 0
      %650 = vmatpush.bf16.msra.mxu0 0
      %651 = vmatpush.bf16.msra.mxu0 0
      %652 = vmatpush.bf16.msra.mxu0 %v612
      %653 = vmatpush.bf16.msra.mxu0 %v611
      %654 = vmatmul.bf16.gmra.mxu0 %v617
      %v655 = vpop.f32.mrf.mxu0
      %v656 = vadd.f32 0.0, %v655
      %v657 = vpop.f32.mrf.mxu0
      %v658 = vadd.f32 0.0, %v657
      %659 = vmatmul.bf16.gmra.mxu0 %v620
      %v660 = vpop.f32.mrf.mxu0
      %v661 = vadd.f32 0.0, %v660
      %v662 = vpop.f32.mrf.mxu0
      %v663 = vadd.f32 0.0, %v662
      %664 = vmatmul.bf16.gmra.mxu0 %v623
      %v665 = vpop.f32.mrf.mxu0
      %v666 = vadd.f32 0.0, %v665
      %v667 = vpop.f32.mrf.mxu0
      %v668 = vadd.f32 0.0, %v667
      %669 = vmatmul.bf16.gmra.mxu0 %v626
      %v670 = vpop.f32.mrf.mxu0
      %v671 = vadd.f32 0.0, %v670
      %v672 = vpop.f32.mrf.mxu0
      %v673 = vadd.f32 0.0, %v672
      %674 = vmatmul.bf16.gmra.mxu0 %v629
      %v675 = vpop.f32.mrf.mxu0
      %v676 = vadd.f32 0.0, %v675
      %v677 = vpop.f32.mrf.mxu0
      %v678 = vadd.f32 0.0, %v677
      %679 = vmatmul.bf16.gmra.mxu0 %v632
      %v680 = vpop.f32.mrf.mxu0
      %v681 = vadd.f32 0.0, %v680
      %v682 = vpop.f32.mrf.mxu0
      %v683 = vadd.f32 0.0, %v682
      %684 = vmatmul.bf16.gmra.mxu0 %v635
      %v685 = vpop.f32.mrf.mxu0
      %v686 = vadd.f32 0.0, %v685
      %v687 = vpop.f32.mrf.mxu0
      %v688 = vadd.f32 0.0, %v687
      %689 = vmatmul.bf16.gmra.mxu0 %v638
      %v690 = vpop.f32.mrf.mxu0
      %v691 = vadd.f32 0.0, %v690
      %v692 = vpop.f32.mrf.mxu0
      %v693 = vadd.f32 0.0, %v692
      %694 = vmatmul.bf16.gmra.mxu0 %v641
      %v695 = vpop.f32.mrf.mxu0
      %v696 = vadd.f32 0.0, %v695
      %v697 = vpop.f32.mrf.mxu0
      %v698 = vadd.f32 0.0, %v697
      %699 = vmatmul.bf16.gmra.mxu0 %v644
      %v700 = vpop.f32.mrf.mxu0
      %v701 = vadd.f32 0.0, %v700
      %v702 = vpop.f32.mrf.mxu0
      %703 = vdwg.mxu0
      %v705 = vunpack.c.l.b16 %v527
      %v706 = vpack.c.b16 %v574, %v705
      %v707 = vpack.c.b16 %v576, %v575
      %v708 = vpack.c.b16 %v578, %v577
      %v709 = vpack.c.b16 %v580, %v579
      %v710 = vpack.c.b16 %v582, %v581
      %v711 = vpack.c.b16 %v584, %v583
      %v712 = vpack.c.b16 %v586, %v585
      %v713 = vpack.c.b16 %v588, %v587
      %v714 = vpack.c.b16 %v590, %v589
      %v715 = vpack.c.b16 %v591, %v591
      %v720 = vunpack.c.l.b16 %v546
      %v721 = vunpack.c.l.b16 %v547
      %v722 = vunpack.c.l.b16 %v548
      %v723 = vunpack.c.l.b16 %v549
      %v724 = vpack.c.b16 %v721, %v720
      %v725 = vpack.c.b16 %v723, %v722
      %v729 = vsel %vm615, %v706, 0
      %v732 = vsel %vm615, %v707, 0
      %v735 = vsel %vm615, %v708, 0
      %v738 = vsel %vm615, %v709, 0
      %v741 = vsel %vm615, %v710, 0
      %v744 = vsel %vm615, %v711, 0
      %v747 = vsel %vm615, %v712, 0
      %v750 = vsel %vm615, %v713, 0
      %v753 = vsel %vm615, %v714, 0
      %v756 = vsel %vm615, %v715, 0
      %758 = vmatpush.bf16.msra.mxu0 0
      %759 = vmatpush.bf16.msra.mxu0 0
      %760 = vmatpush.bf16.msra.mxu0 0
      %761 = vmatpush.bf16.msra.mxu0 0
      %762 = vmatpush.bf16.msra.mxu0 0
      %763 = vmatpush.bf16.msra.mxu0 0
      %764 = vmatpush.bf16.msra.mxu0 %v725
      %765 = vmatpush.bf16.msra.mxu0 %v724
      %766 = vmatmul.bf16.gmra.mxu0 %v729
      %v767 = vpop.f32.mrf.mxu0
      %v768 = vadd.f32 %v656, %v767
      %v769 = vpop.f32.mrf.mxu0
      %v770 = vadd.f32 %v658, %v769
      %771 = vmatmul.bf16.gmra.mxu0 %v732
      %v772 = vpop.f32.mrf.mxu0
      %v773 = vadd.f32 %v661, %v772
      %v774 = vpop.f32.mrf.mxu0
      %v775 = vadd.f32 %v663, %v774
      %776 = vmatmul.bf16.gmra.mxu0 %v735
      %v777 = vpop.f32.mrf.mxu0
      %v778 = vadd.f32 %v666, %v777
      %v779 = vpop.f32.mrf.mxu0
      %v780 = vadd.f32 %v668, %v779
      %781 = vmatmul.bf16.gmra.mxu0 %v738
      %v782 = vpop.f32.mrf.mxu0
      %v783 = vadd.f32 %v671, %v782
      %v784 = vpop.f32.mrf.mxu0
      %v785 = vadd.f32 %v673, %v784
      %786 = vmatmul.bf16.gmra.mxu0 %v741
      %v787 = vpop.f32.mrf.mxu0
      %v788 = vadd.f32 %v676, %v787
      %v789 = vpop.f32.mrf.mxu0
      %v790 = vadd.f32 %v678, %v789
      %791 = vmatmul.bf16.gmra.mxu0 %v744
      %v792 = vpop.f32.mrf.mxu0
      %v793 = vadd.f32 %v681, %v792
      %v794 = vpop.f32.mrf.mxu0
      %v795 = vadd.f32 %v683, %v794
      %796 = vmatmul.bf16.gmra.mxu0 %v747
      %v797 = vpop.f32.mrf.mxu0
      %v798 = vadd.f32 %v686, %v797
      %v799 = vpop.f32.mrf.mxu0
      %v800 = vadd.f32 %v688, %v799
      %801 = vmatmul.bf16.gmra.mxu0 %v750
      %v802 = vpop.f32.mrf.mxu0
      %v803 = vadd.f32 %v691, %v802
      %v804 = vpop.f32.mrf.mxu0
      %v805 = vadd.f32 %v693, %v804
      %806 = vmatmul.bf16.gmra.mxu0 %v753
      %v807 = vpop.f32.mrf.mxu0
      %v808 = vadd.f32 %v696, %v807
      %v809 = vpop.f32.mrf.mxu0
      %v810 = vadd.f32 %v698, %v809
      %811 = vmatmul.bf16.gmra.mxu0 %v756
      %v812 = vpop.f32.mrf.mxu0
      %v813 = vadd.f32 %v701, %v812
      %v814 = vpop.f32.mrf.mxu0
      %815 = vdwg.mxu0
      %v816 = vld [vmem:[#allocation2 + $0x14] sm:$0xf]
      %v817 = vld [vmem:[#allocation2 + $0x18] sm:$0xf]
      %v818 = vld [vmem:[#allocation2 + $0x1c] sm:$0xf]
      %v819 = vld [vmem:[#allocation2 + $0x20] sm:$0xf]
      %v820 = vld [vmem:[#allocation2 + $0x24] sm:$0xf]
      %v821 = vld [vmem:[#allocation2 + $0x28] sm:$0xf]
      %v822 = vld [vmem:[#allocation2 + $0x2c] sm:$0xf]
      %v823 = vld [vmem:[#allocation2 + $0x30] sm:$0xf]
      %v824 = vld [vmem:[#allocation2 + $0x34] sm:$0xf]
      %v825 = vld [vmem:[#allocation2 + $0x38] sm:$0xf]
      %v826 = vld [vmem:[#allocation2 + $0x3c] sm:$0xf]
      %v827 = vld [vmem:[#allocation2 + $0x40] sm:$0xf]
      %v828 = vld [vmem:[#allocation2 + $0x44] sm:$0xf]
      %v829 = vld [vmem:[#allocation2 + $0x48] sm:$0xf]
      %v830 = vld [vmem:[#allocation2 + $0x4c] sm:$0xf]
      %v831 = vld [vmem:[#allocation2 + $0x50] sm:$0xf]
      %v832 = vld [vmem:[#allocation2 + $0x54] sm:$0xf]
      %v833 = vld [vmem:[#allocation2 + $0x58] sm:$0xf]
      %v834 = vld [vmem:[#allocation2 + $0x5c] sm:$0xf]
      %v835 = vld [vmem:[%s2 + $0x40] sm:$0xf]
      %v836 = vld [vmem:[%s2 + $0x44] sm:$0xf]
      %v837 = vld [vmem:[%s2 + $0x48] sm:$0xf]
      %v838 = vld [vmem:[%s2 + $0x4c] sm:$0xf]
      %v858 = vunpack.c.l.b16 %v816
      %v859 = vunpack.c.l.b16 %v817
      %v860 = vunpack.c.l.b16 %v818
      %v861 = vunpack.c.l.b16 %v819
      %v862 = vunpack.c.l.b16 %v820
      %v863 = vunpack.c.l.b16 %v821
      %v864 = vunpack.c.l.b16 %v822
      %v865 = vunpack.c.l.b16 %v823
      %v866 = vunpack.c.l.b16 %v824
      %v867 = vunpack.c.l.b16 %v825
      %v868 = vunpack.c.l.b16 %v826
      %v869 = vunpack.c.l.b16 %v827
      %v870 = vunpack.c.l.b16 %v828
      %v871 = vunpack.c.l.b16 %v829
      %v872 = vunpack.c.l.b16 %v830
      %v873 = vunpack.c.l.b16 %v831
      %v874 = vunpack.c.l.b16 %v832
      %v875 = vunpack.c.l.b16 %v833
      %v876 = vunpack.c.l.b16 %v834
      %v877 = vpack.c.b16 %v859, %v858
      %v878 = vpack.c.b16 %v861, %v860
      %v879 = vpack.c.b16 %v863, %v862
      %v880 = vpack.c.b16 %v865, %v864
      %v881 = vpack.c.b16 %v867, %v866
      %v882 = vpack.c.b16 %v869, %v868
      %v883 = vpack.c.b16 %v871, %v870
      %v884 = vpack.c.b16 %v873, %v872
      %v885 = vpack.c.b16 %v875, %v874
      %v886 = vpack.c.b16 %v876, %v876
      %v891 = vunpack.c.l.b16 %v835
      %v892 = vunpack.c.l.b16 %v836
      %v893 = vunpack.c.l.b16 %v837
      %v894 = vunpack.c.l.b16 %v838
      %v895 = vpack.c.b16 %v892, %v891
      %v896 = vpack.c.b16 %v894, %v893
      %v900 = vsel %vm615, %v877, 0
      %v903 = vsel %vm615, %v878, 0
      %v906 = vsel %vm615, %v879, 0
      %v909 = vsel %vm615, %v880, 0
      %v912 = vsel %vm615, %v881, 0
      %v915 = vsel %vm615, %v882, 0
      %v918 = vsel %vm615, %v883, 0
      %v921 = vsel %vm615, %v884, 0
      %v924 = vsel %vm615, %v885, 0
      %v927 = vsel %vm615, %v886, 0
      %929 = vmatpush.bf16.msra.mxu0 0
      %930 = vmatpush.bf16.msra.mxu0 0
      %931 = vmatpush.bf16.msra.mxu0 0
      %932 = vmatpush.bf16.msra.mxu0 0
      %933 = vmatpush.bf16.msra.mxu0 0
      %934 = vmatpush.bf16.msra.mxu0 0
      %935 = vmatpush.bf16.msra.mxu0 %v896
      %936 = vmatpush.bf16.msra.mxu0 %v895
      %937 = vmatmul.bf16.gmra.mxu0 %v900
      %v938 = vpop.f32.mrf.mxu0
      %v939 = vadd.f32 0.0, %v938
      %v940 = vpop.f32.mrf.mxu0
      %v941 = vadd.f32 0.0, %v940
      %942 = vmatmul.bf16.gmra.mxu0 %v903
      %v943 = vpop.f32.mrf.mxu0
      %v944 = vadd.f32 0.0, %v943
      %v945 = vpop.f32.mrf.mxu0
      %v946 = vadd.f32 0.0, %v945
      %947 = vmatmul.bf16.gmra.mxu0 %v906
      %v948 = vpop.f32.mrf.mxu0
      %v949 = vadd.f32 0.0, %v948
      %v950 = vpop.f32.mrf.mxu0
      %v951 = vadd.f32 0.0, %v950
      %952 = vmatmul.bf16.gmra.mxu0 %v909
      %v953 = vpop.f32.mrf.mxu0
      %v954 = vadd.f32 0.0, %v953
      %v955 = vpop.f32.mrf.mxu0
      %v956 = vadd.f32 0.0, %v955
      %957 = vmatmul.bf16.gmra.mxu0 %v912
      %v958 = vpop.f32.mrf.mxu0
      %v959 = vadd.f32 0.0, %v958
      %v960 = vpop.f32.mrf.mxu0
      %v961 = vadd.f32 0.0, %v960
      %962 = vmatmul.bf16.gmra.mxu0 %v915
      %v963 = vpop.f32.mrf.mxu0
      %v964 = vadd.f32 0.0, %v963
      %v965 = vpop.f32.mrf.mxu0
      %v966 = vadd.f32 0.0, %v965
      %967 = vmatmul.bf16.gmra.mxu0 %v918
      %v968 = vpop.f32.mrf.mxu0
      %v969 = vadd.f32 0.0, %v968
      %v970 = vpop.f32.mrf.mxu0
      %v971 = vadd.f32 0.0, %v970
      %972 = vmatmul.bf16.gmra.mxu0 %v921
      %v973 = vpop.f32.mrf.mxu0
      %v974 = vadd.f32 0.0, %v973
      %v975 = vpop.f32.mrf.mxu0
      %v976 = vadd.f32 0.0, %v975
      %977 = vmatmul.bf16.gmra.mxu0 %v924
      %v978 = vpop.f32.mrf.mxu0
      %v979 = vadd.f32 0.0, %v978
      %v980 = vpop.f32.mrf.mxu0
      %v981 = vadd.f32 0.0, %v980
      %982 = vmatmul.bf16.gmra.mxu0 %v927
      %v983 = vpop.f32.mrf.mxu0
      %v984 = vadd.f32 0.0, %v983
      %v985 = vpop.f32.mrf.mxu0
      %986 = vdwg.mxu0
      %v987 = vadd.f32 %v768, %v939
      %v988 = vadd.f32 %v770, %v941
      %v989 = vadd.f32 %v773, %v944
      %v990 = vadd.f32 %v775, %v946
      %v991 = vadd.f32 %v778, %v949
      %v992 = vadd.f32 %v780, %v951
      %v993 = vadd.f32 %v783, %v954
      %v994 = vadd.f32 %v785, %v956
      %v995 = vadd.f32 %v788, %v959
      %v996 = vadd.f32 %v790, %v961
      %v997 = vadd.f32 %v793, %v964
      %v998 = vadd.f32 %v795, %v966
      %v999 = vadd.f32 %v798, %v969
      %v1000 = vadd.f32 %v800, %v971
      %v1001 = vadd.f32 %v803, %v974
      %v1002 = vadd.f32 %v805, %v976
      %v1003 = vadd.f32 %v808, %v979
      %v1004 = vadd.f32 %v810, %v981
      %v1005 = vadd.f32 %v813, %v984
      %v1006 = vld [vmem:[#allocation2 + $0x18] sm:$0xf]
      %v1007 = vld [vmem:[#allocation2 + $0x1c] sm:$0xf]
      %v1008 = vld [vmem:[#allocation2 + $0x20] sm:$0xf]
      %v1009 = vld [vmem:[#allocation2 + $0x24] sm:$0xf]
      %v1010 = vld [vmem:[#allocation2 + $0x28] sm:$0xf]
      %v1011 = vld [vmem:[#allocation2 + $0x2c] sm:$0xf]
      %v1012 = vld [vmem:[#allocation2 + $0x30] sm:$0xf]
      %v1013 = vld [vmem:[#allocation2 + $0x34] sm:$0xf]
      %v1014 = vld [vmem:[#allocation2 + $0x38] sm:$0xf]
      %v1015 = vld [vmem:[#allocation2 + $0x3c] sm:$0xf]
      %v1016 = vld [vmem:[#allocation2 + $0x40] sm:$0xf]
      %v1017 = vld [vmem:[#allocation2 + $0x44] sm:$0xf]
      %v1018 = vld [vmem:[#allocation2 + $0x48] sm:$0xf]
      %v1019 = vld [vmem:[#allocation2 + $0x4c] sm:$0xf]
      %v1020 = vld [vmem:[#allocation2 + $0x50] sm:$0xf]
      %v1021 = vld [vmem:[#allocation2 + $0x54] sm:$0xf]
      %v1022 = vld [vmem:[#allocation2 + $0x58] sm:$0xf]
      %v1023 = vld [vmem:[#allocation2 + $0x5c] sm:$0xf]
      %v1024 = vld [vmem:[#allocation2 + $0x60] sm:$0xf]
      %v1025 = vld [vmem:[%s2 + $0x50] sm:$0xf]
      %v1026 = vld [vmem:[%s2 + $0x54] sm:$0xf]
      %v1027 = vld [vmem:[%s2 + $0x58] sm:$0xf]
      %v1028 = vld [vmem:[%s2 + $0x5c] sm:$0xf]
      %v1048 = vunpack.c.l.b16 %v1006
      %v1049 = vunpack.c.l.b16 %v1007
      %v1050 = vunpack.c.l.b16 %v1008
      %v1051 = vunpack.c.l.b16 %v1009
      %v1052 = vunpack.c.l.b16 %v1010
      %v1053 = vunpack.c.l.b16 %v1011
      %v1054 = vunpack.c.l.b16 %v1012
      %v1055 = vunpack.c.l.b16 %v1013
      %v1056 = vunpack.c.l.b16 %v1014
      %v1057 = vunpack.c.l.b16 %v1015
      %v1058 = vunpack.c.l.b16 %v1016
      %v1059 = vunpack.c.l.b16 %v1017
      %v1060 = vunpack.c.l.b16 %v1018
      %v1061 = vunpack.c.l.b16 %v1019
      %v1062 = vunpack.c.l.b16 %v1020
      %v1063 = vunpack.c.l.b16 %v1021
      %v1064 = vunpack.c.l.b16 %v1022
      %v1065 = vunpack.c.l.b16 %v1023
      %v1066 = vunpack.c.l.b16 %v1024
      %v1067 = vpack.c.b16 %v1049, %v1048
      %v1068 = vpack.c.b16 %v1051, %v1050
      %v1069 = vpack.c.b16 %v1053, %v1052
      %v1070 = vpack.c.b16 %v1055, %v1054
      %v1071 = vpack.c.b16 %v1057, %v1056
      %v1072 = vpack.c.b16 %v1059, %v1058
      %v1073 = vpack.c.b16 %v1061, %v1060
      %v1074 = vpack.c.b16 %v1063, %v1062
      %v1075 = vpack.c.b16 %v1065, %v1064
      %v1076 = vpack.c.b16 %v1066, %v1066
      %v1081 = vunpack.c.l.b16 %v1025
      %v1082 = vunpack.c.l.b16 %v1026
      %v1083 = vunpack.c.l.b16 %v1027
      %v1084 = vunpack.c.l.b16 %v1028
      %v1085 = vpack.c.b16 %v1082, %v1081
      %v1086 = vpack.c.b16 %v1084, %v1083
      %v1090 = vsel %vm615, %v1067, 0
      %v1093 = vsel %vm615, %v1068, 0
      %v1096 = vsel %vm615, %v1069, 0
      %v1099 = vsel %vm615, %v1070, 0
      %v1102 = vsel %vm615, %v1071, 0
      %v1105 = vsel %vm615, %v1072, 0
      %v1108 = vsel %vm615, %v1073, 0
      %v1111 = vsel %vm615, %v1074, 0
      %v1114 = vsel %vm615, %v1075, 0
      %v1117 = vsel %vm615, %v1076, 0
      %1119 = vmatpush.bf16.msra.mxu0 0
      %1120 = vmatpush.bf16.msra.mxu0 0
      %1121 = vmatpush.bf16.msra.mxu0 0
      %1122 = vmatpush.bf16.msra.mxu0 0
      %1123 = vmatpush.bf16.msra.mxu0 0
      %1124 = vmatpush.bf16.msra.mxu0 0
      %1125 = vmatpush.bf16.msra.mxu0 %v1086
      %1126 = vmatpush.bf16.msra.mxu0 %v1085
      %1127 = vmatmul.bf16.gmra.mxu0 %v1090
      %v1128 = vpop.f32.mrf.mxu0
      %v1129 = vadd.f32 0.0, %v1128
      %v1130 = vpop.f32.mrf.mxu0
      %v1131 = vadd.f32 0.0, %v1130
      %1132 = vmatmul.bf16.gmra.mxu0 %v1093
      %v1133 = vpop.f32.mrf.mxu0
      %v1134 = vadd.f32 0.0, %v1133
      %v1135 = vpop.f32.mrf.mxu0
      %v1136 = vadd.f32 0.0, %v1135
      %1137 = vmatmul.bf16.gmra.mxu0 %v1096
      %v1138 = vpop.f32.mrf.mxu0
      %v1139 = vadd.f32 0.0, %v1138
      %v1140 = vpop.f32.mrf.mxu0
      %v1141 = vadd.f32 0.0, %v1140
      %1142 = vmatmul.bf16.gmra.mxu0 %v1099
      %v1143 = vpop.f32.mrf.mxu0
      %v1144 = vadd.f32 0.0, %v1143
      %v1145 = vpop.f32.mrf.mxu0
      %v1146 = vadd.f32 0.0, %v1145
      %1147 = vmatmul.bf16.gmra.mxu0 %v1102
      %v1148 = vpop.f32.mrf.mxu0
      %v1149 = vadd.f32 0.0, %v1148
      %v1150 = vpop.f32.mrf.mxu0
      %v1151 = vadd.f32 0.0, %v1150
      %1152 = vmatmul.bf16.gmra.mxu0 %v1105
      %v1153 = vpop.f32.mrf.mxu0
      %v1154 = vadd.f32 0.0, %v1153
      %v1155 = vpop.f32.mrf.mxu0
      %v1156 = vadd.f32 0.0, %v1155
      %1157 = vmatmul.bf16.gmra.mxu0 %v1108
      %v1158 = vpop.f32.mrf.mxu0
      %v1159 = vadd.f32 0.0, %v1158
      %v1160 = vpop.f32.mrf.mxu0
      %v1161 = vadd.f32 0.0, %v1160
      %1162 = vmatmul.bf16.gmra.mxu0 %v1111
      %v1163 = vpop.f32.mrf.mxu0
      %v1164 = vadd.f32 0.0, %v1163
      %v1165 = vpop.f32.mrf.mxu0
      %v1166 = vadd.f32 0.0, %v1165
      %1167 = vmatmul.bf16.gmra.mxu0 %v1114
      %v1168 = vpop.f32.mrf.mxu0
      %v1169 = vadd.f32 0.0, %v1168
      %v1170 = vpop.f32.mrf.mxu0
      %v1171 = vadd.f32 0.0, %v1170
      %1172 = vmatmul.bf16.gmra.mxu0 %v1117
      %v1173 = vpop.f32.mrf.mxu0
      %v1174 = vadd.f32 0.0, %v1173
      %v1175 = vpop.f32.mrf.mxu0
      %1176 = vdwg.mxu0
      %v1177 = vadd.f32 %v987, %v1129
      %v1178 = vadd.f32 %v988, %v1131
      %v1179 = vadd.f32 %v989, %v1134
      %v1180 = vadd.f32 %v990, %v1136
      %v1181 = vadd.f32 %v991, %v1139
      %v1182 = vadd.f32 %v992, %v1141
      %v1183 = vadd.f32 %v993, %v1144
      %v1184 = vadd.f32 %v994, %v1146
      %v1185 = vadd.f32 %v995, %v1149
      %v1186 = vadd.f32 %v996, %v1151
      %v1187 = vadd.f32 %v997, %v1154
      %v1188 = vadd.f32 %v998, %v1156
      %v1189 = vadd.f32 %v999, %v1159
      %v1190 = vadd.f32 %v1000, %v1161
      %v1191 = vadd.f32 %v1001, %v1164
      %v1192 = vadd.f32 %v1002, %v1166
      %v1193 = vadd.f32 %v1003, %v1169
      %v1194 = vadd.f32 %v1004, %v1171
      %v1195 = vadd.f32 %v1005, %v1174
      %v1196 = vld [vmem:[%s3 + $0x1] sm:$0x1]
      %v1197 = vperm.slane %v1196, 0
      %v1198 = vadd.f32 %v1177, %v1197
      %v1199 = vadd.f32 %v1178, %v1197
      %v1200 = vadd.f32 %v1179, %v1197
      %v1201 = vadd.f32 %v1180, %v1197
      %v1202 = vadd.f32 %v1181, %v1197
      %v1203 = vadd.f32 %v1182, %v1197
      %v1204 = vadd.f32 %v1183, %v1197
      %v1205 = vadd.f32 %v1184, %v1197
      %v1206 = vadd.f32 %v1185, %v1197
      %v1207 = vadd.f32 %v1186, %v1197
      %v1208 = vadd.f32 %v1187, %v1197
      %v1209 = vadd.f32 %v1188, %v1197
      %v1210 = vadd.f32 %v1189, %v1197
      %v1211 = vadd.f32 %v1190, %v1197
      %v1212 = vadd.f32 %v1191, %v1197
      %v1213 = vadd.f32 %v1192, %v1197
      %v1214 = vadd.f32 %v1193, %v1197
      %v1215 = vadd.f32 %v1194, %v1197
      %v1216 = vadd.f32 %v1195, %v1197
      %v1217 = vmax.f32 %v1198, 0.0
      %v1218 = vmax.f32 %v1199, 0.0
      %v1219 = vmax.f32 %v1200, 0.0
      %v1220 = vmax.f32 %v1201, 0.0
      %v1221 = vmax.f32 %v1202, 0.0
      %v1222 = vmax.f32 %v1203, 0.0
      %v1223 = vmax.f32 %v1204, 0.0
      %v1224 = vmax.f32 %v1205, 0.0
      %v1225 = vmax.f32 %v1206, 0.0
      %v1226 = vmax.f32 %v1207, 0.0
      %v1227 = vmax.f32 %v1208, 0.0
      %v1228 = vmax.f32 %v1209, 0.0
      %v1229 = vmax.f32 %v1210, 0.0
      %v1230 = vmax.f32 %v1211, 0.0
      %v1231 = vmax.f32 %v1212, 0.0
      %v1232 = vmax.f32 %v1213, 0.0
      %v1233 = vmax.f32 %v1214, 0.0
      %v1234 = vmax.f32 %v1215, 0.0
      %v1235 = vmax.f32 %v1216, 0.0
      %v1236 = vpack.c.bf16 %v1217, %v1217
      %v1237 = vpack.c.bf16 %v1218, %v1218
      %v1238 = vpack.c.bf16 %v1219, %v1219
      %v1239 = vpack.c.bf16 %v1220, %v1220
      %v1240 = vpack.c.bf16 %v1221, %v1221
      %v1241 = vpack.c.bf16 %v1222, %v1222
      %v1242 = vpack.c.bf16 %v1223, %v1223
      %v1243 = vpack.c.bf16 %v1224, %v1224
      %v1244 = vpack.c.bf16 %v1225, %v1225
      %v1245 = vpack.c.bf16 %v1226, %v1226
      %v1246 = vpack.c.bf16 %v1227, %v1227
      %v1247 = vpack.c.bf16 %v1228, %v1228
      %v1248 = vpack.c.bf16 %v1229, %v1229
      %v1249 = vpack.c.bf16 %v1230, %v1230
      %v1250 = vpack.c.bf16 %v1231, %v1231
      %v1251 = vpack.c.bf16 %v1232, %v1232
      %v1252 = vpack.c.bf16 %v1233, %v1233
      %v1253 = vpack.c.bf16 %v1234, %v1234
      %v1254 = vpack.c.bf16 %v1235, %v1235
      %1255 = vst.msk [vmem:[#allocation3] sm:$0xf] %vm501, %v1236
      %1256 = vst.msk [vmem:[#allocation3 + $0x4] sm:$0xf] %vm501, %v1237
      %1257 = vst.msk [vmem:[#allocation3 + $0x8] sm:$0xf] %vm501, %v1238
      %1258 = vst.msk [vmem:[#allocation3 + $0xc] sm:$0xf] %vm501, %v1239
      %1259 = vst.msk [vmem:[#allocation3 + $0x10] sm:$0xf] %vm501, %v1240
      %1260 = vst.msk [vmem:[#allocation3 + $0x14] sm:$0xf] %vm501, %v1241
      %1261 = vst.msk [vmem:[#allocation3 + $0x18] sm:$0xf] %vm501, %v1242
      %1262 = vst.msk [vmem:[#allocation3 + $0x1c] sm:$0xf] %vm501, %v1243
      %1263 = vst.msk [vmem:[#allocation3 + $0x20] sm:$0xf] %vm501, %v1244
      %1264 = vst.msk [vmem:[#allocation3 + $0x24] sm:$0xf] %vm501, %v1245
      %1265 = vst.msk [vmem:[#allocation3 + $0x28] sm:$0xf] %vm501, %v1246
      %1266 = vst.msk [vmem:[#allocation3 + $0x2c] sm:$0xf] %vm501, %v1247
      %1267 = vst.msk [vmem:[#allocation3 + $0x30] sm:$0xf] %vm501, %v1248
      %1268 = vst.msk [vmem:[#allocation3 + $0x34] sm:$0xf] %vm501, %v1249
      %1269 = vst.msk [vmem:[#allocation3 + $0x38] sm:$0xf] %vm501, %v1250
      %1270 = vst.msk [vmem:[#allocation3 + $0x3c] sm:$0xf] %vm501, %v1251
      %1271 = vst.msk [vmem:[#allocation3 + $0x40] sm:$0xf] %vm501, %v1252
      %1272 = vst.msk [vmem:[#allocation3 + $0x44] sm:$0xf] %vm501, %v1253
      %1273 = vst.msk [vmem:[#allocation3 + $0x48] sm:$0xf] %vm501, %v1254
      %v1274 = vld [vmem:[%s2 + $0x60] sm:$0xf]
      %v1275 = vld [vmem:[%s2 + $0x64] sm:$0xf]
      %v1276 = vld [vmem:[%s2 + $0x68] sm:$0xf]
      %v1277 = vld [vmem:[%s2 + $0x6c] sm:$0xf]
      %v1278 = vld [vmem:[%s2 + $0x70] sm:$0xf]
      %v1279 = vld [vmem:[%s2 + $0x74] sm:$0xf]
      %v1280 = vld [vmem:[%s2 + $0x78] sm:$0xf]
      %v1281 = vld [vmem:[%s2 + $0x7c] sm:$0xf]
      %v1282 = vld [vmem:[%s2 + $0x80] sm:$0xf]
      %v1283 = vld [vmem:[%s2 + $0x84] sm:$0xf]
      %v1284 = vld [vmem:[%s2 + $0x88] sm:$0xf]
      %v1285 = vld [vmem:[%s2 + $0x8c] sm:$0xf]
      %v1286 = vld [vmem:[%s2 + $0x90] sm:$0xf]
      %v1287 = vld [vmem:[%s2 + $0x94] sm:$0xf]
      %v1288 = vld [vmem:[%s2 + $0x98] sm:$0xf]
      %v1289 = vld [vmem:[%s2 + $0x9c] sm:$0xf]
      %v1290 = vld [vmem:[%s2 + $0xa0] sm:$0xf]
      %v1291 = vld [vmem:[%s2 + $0xa4] sm:$0xf]
      %v1292 = vld [vmem:[%s2 + $0xa8] sm:$0xf]
      %v1293 = vld [vmem:[%s2 + $0xac] sm:$0xf]
      %v1294 = vld [vmem:[%s2 + $0xb0] sm:$0xf]
      %v1295 = vld [vmem:[%s2 + $0xb4] sm:$0xf]
      %v1296 = vld [vmem:[%s2 + $0xb8] sm:$0xf]
      %v1297 = vld [vmem:[%s2 + $0xbc] sm:$0xf]
      %v1298 = vld [vmem:[%s2 + $0xc0] sm:$0xf]
      %v1299 = vld [vmem:[%s2 + $0xc4] sm:$0xf]
      %v1300 = vld [vmem:[%s2 + $0xc8] sm:$0xf]
      %v1301 = vld [vmem:[%s2 + $0xcc] sm:$0xf]
      %v1302 = vld [vmem:[%s2 + $0xd0] sm:$0xf]
      %v1303 = vld [vmem:[%s2 + $0xd4] sm:$0xf]
      %v1304 = vld [vmem:[%s2 + $0xd8] sm:$0xf]
      %v1305 = vld [vmem:[%s2 + $0xdc] sm:$0xf]
      %v1306 = vld [vmem:[%s2 + $0xe0] sm:$0xf]
      %v1307 = vld [vmem:[%s2 + $0xe4] sm:$0xf]
      %v1308 = vld [vmem:[%s2 + $0xe8] sm:$0xf]
      %v1309 = vld [vmem:[%s2 + $0xec] sm:$0xf]
      %v1310 = vld [vmem:[%s2 + $0xf0] sm:$0xf]
      %v1311 = vld [vmem:[%s2 + $0xf4] sm:$0xf]
      %v1312 = vld [vmem:[%s2 + $0xf8] sm:$0xf]
      %v1313 = vld [vmem:[%s2 + $0xfc] sm:$0xf]
      %v1314 = vld [vmem:[%s2 + $0x100] sm:$0xf]
      %v1315 = vld [vmem:[%s2 + $0x104] sm:$0xf]
      %v1316 = vld [vmem:[%s2 + $0x108] sm:$0xf]
      %v1317 = vld [vmem:[%s2 + $0x10c] sm:$0xf]
      %v1318 = vld [vmem:[%s2 + $0x110] sm:$0xf]
      %v1319 = vld [vmem:[%s2 + $0x114] sm:$0xf]
      %v1320 = vld [vmem:[%s2 + $0x118] sm:$0xf]
      %v1321 = vld [vmem:[%s2 + $0x11c] sm:$0xf]
      %v1322 = vld [vmem:[%s2 + $0x120] sm:$0xf]
      %v1323 = vld [vmem:[%s2 + $0x124] sm:$0xf]
      %v1324 = vld [vmem:[%s2 + $0x128] sm:$0xf]
      %v1325 = vld [vmem:[%s2 + $0x12c] sm:$0xf]
      %v1326 = vld [vmem:[%s2 + $0x130] sm:$0xf]
      %v1327 = vld [vmem:[%s2 + $0x134] sm:$0xf]
      %v1328 = vld [vmem:[%s2 + $0x138] sm:$0xf]
      %v1329 = vld [vmem:[%s2 + $0x13c] sm:$0xf]
      %v1330 = vld [vmem:[%s2 + $0x140] sm:$0xf]
      %v1331 = vld [vmem:[%s2 + $0x144] sm:$0xf]
      %v1332 = vld [vmem:[%s2 + $0x148] sm:$0xf]
      %v1333 = vld [vmem:[%s2 + $0x14c] sm:$0xf]
      %v1334 = vld [vmem:[%s2 + $0x150] sm:$0xf]
      %v1335 = vld [vmem:[%s2 + $0x154] sm:$0xf]
      %v1336 = vld [vmem:[%s2 + $0x158] sm:$0xf]
      %v1337 = vld [vmem:[%s2 + $0x15c] sm:$0xf]
      %v1338 = vld [vmem:[#allocation3] sm:$0xf]
      %v1339 = vld [vmem:[#allocation3 + $0x4] sm:$0xf]
      %v1340 = vld [vmem:[#allocation3 + $0x8] sm:$0xf]
      %v1341 = vld [vmem:[#allocation3 + $0xc] sm:$0xf]
      %v1342 = vld [vmem:[#allocation3 + $0x14] sm:$0xf]
      %v1343 = vld [vmem:[#allocation3 + $0x18] sm:$0xf]
      %v1344 = vld [vmem:[#allocation3 + $0x1c] sm:$0xf]
      %v1345 = vld [vmem:[#allocation3 + $0x20] sm:$0xf]
      %v1346 = vld [vmem:[#allocation3 + $0x28] sm:$0xf]
      %v1347 = vld [vmem:[#allocation3 + $0x2c] sm:$0xf]
      %v1348 = vld [vmem:[#allocation3 + $0x30] sm:$0xf]
      %v1349 = vld [vmem:[#allocation3 + $0x34] sm:$0xf]
      %v1350 = vld [vmem:[#allocation3 + $0x3c] sm:$0xf]
      %v1351 = vld [vmem:[#allocation3 + $0x40] sm:$0xf]
      %v1352 = vld [vmem:[#allocation3 + $0x44] sm:$0xf]
      %v1353 = vld [vmem:[#allocation3 + $0x48] sm:$0xf]
      %v1355 = vunpack.c.l.b16 %v1339
      %v1356 = vpack.c.b16 %v1355, %v1355
      %1357 = vrot.lane.b32.xlu0 %v1356, 32
      %v1358 = vpop.permute.xlu0 %1357
      %v1360 = vunpack.c.l.b16 %v1340
      %v1361 = vpack.c.b16 %v1360, %v1360
      %1362 = vrot.lane.b32.xlu0 %v1361, 64
      %v1363 = vpop.permute.xlu0 %1362
      %v1365 = vunpack.c.l.b16 %v1341
      %v1366 = vpack.c.b16 %v1365, %v1365
      %1367 = vrot.lane.b32.xlu0 %v1366, 96
      %v1368 = vpop.permute.xlu0 %1367
      %v1370 = vunpack.c.l.b16 %v1343
      %v1371 = vpack.c.b16 %v1370, %v1370
      %1372 = vrot.lane.b32.xlu0 %v1371, 32
      %v1373 = vpop.permute.xlu0 %1372
      %v1375 = vunpack.c.l.b16 %v1344
      %v1376 = vpack.c.b16 %v1375, %v1375
      %1377 = vrot.lane.b32.xlu0 %v1376, 64
      %v1378 = vpop.permute.xlu0 %1377
      %v1380 = vunpack.c.l.b16 %v1345
      %v1381 = vpack.c.b16 %v1380, %v1380
      %1382 = vrot.lane.b32.xlu0 %v1381, 96
      %v1383 = vpop.permute.xlu0 %1382
      %v1385 = vunpack.c.l.b16 %v1347
      %v1386 = vpack.c.b16 %v1385, %v1385
      %1387 = vrot.lane.b32.xlu0 %v1386, 32
      %v1388 = vpop.permute.xlu0 %1387
      %v1390 = vunpack.c.l.b16 %v1348
      %v1391 = vpack.c.b16 %v1390, %v1390
      %1392 = vrot.lane.b32.xlu0 %v1391, 64
      %v1393 = vpop.permute.xlu0 %1392
      %v1395 = vunpack.c.l.b16 %v1349
      %v1396 = vpack.c.b16 %v1395, %v1395
      %1397 = vrot.lane.b32.xlu0 %v1396, 96
      %v1398 = vpop.permute.xlu0 %1397
      %v1400 = vunpack.c.l.b16 %v1351
      %v1401 = vpack.c.b16 %v1400, %v1400
      %1402 = vrot.lane.b32.xlu0 %v1401, 32
      %v1403 = vpop.permute.xlu0 %1402
      %v1405 = vunpack.c.l.b16 %v1352
      %v1406 = vpack.c.b16 %v1405, %v1405
      %1407 = vrot.lane.b32.xlu0 %v1406, 64
      %v1408 = vpop.permute.xlu0 %1407
      %v1410 = vunpack.c.l.b16 %v1353
      %v1411 = vpack.c.b16 %v1410, %v1410
      %1412 = vrot.lane.b32.xlu0 %v1411, 96
      %v1413 = vpop.permute.xlu0 %1412
      %v1416 = vsel %vm615, %v1338, %v1358
      %v1418 = vsel %vm338, %v1416, %v1363
      %vm1419 = vcmask 785408
      %v1421 = vsel %vm1419, %v1418, %v1368
      %v1425 = vsel %vm615, %v1342, %v1373
      %v1427 = vsel %vm338, %v1425, %v1378
      %v1429 = vsel %vm1419, %v1427, %v1383
      %v1433 = vsel %vm615, %v1346, %v1388
      %v1435 = vsel %vm338, %v1433, %v1393
      %v1437 = vsel %vm1419, %v1435, %v1398
      %v1441 = vsel %vm615, %v1350, %v1403
      %v1443 = vsel %vm338, %v1441, %v1408
      %v1445 = vsel %vm1419, %v1443, %v1413
      %v1447 = vld [vmem:[%s3 + $0x2] sm:$0x1]
      %v1448 = vperm.slane %v1447, 0
      %v1513 = vunpack.c.l.b16 %v1274
      %v1514 = vunpack.c.l.b16 %v1275
      %v1515 = vunpack.c.l.b16 %v1276
      %v1516 = vunpack.c.l.b16 %v1277
      %v1517 = vunpack.c.l.b16 %v1278
      %v1518 = vunpack.c.l.b16 %v1279
      %v1519 = vunpack.c.l.b16 %v1280
      %v1520 = vunpack.c.l.b16 %v1281
      %v1521 = vunpack.c.l.b16 %v1282
      %v1522 = vunpack.c.l.b16 %v1283
      %v1523 = vunpack.c.l.b16 %v1284
      %v1524 = vunpack.c.l.b16 %v1285
      %v1525 = vunpack.c.l.b16 %v1286
      %v1526 = vunpack.c.l.b16 %v1287
      %v1527 = vunpack.c.l.b16 %v1288
      %v1528 = vunpack.c.l.b16 %v1289
      %v1529 = vunpack.c.l.b16 %v1290
      %v1530 = vunpack.c.l.b16 %v1291
      %v1531 = vunpack.c.l.b16 %v1292
      %v1532 = vunpack.c.l.b16 %v1293
      %v1533 = vunpack.c.l.b16 %v1294
      %v1534 = vunpack.c.l.b16 %v1295
      %v1535 = vunpack.c.l.b16 %v1296
      %v1536 = vunpack.c.l.b16 %v1297
      %v1537 = vunpack.c.l.b16 %v1298
      %v1538 = vunpack.c.l.b16 %v1299
      %v1539 = vunpack.c.l.b16 %v1300
      %v1540 = vunpack.c.l.b16 %v1301
      %v1541 = vunpack.c.l.b16 %v1302
      %v1542 = vunpack.c.l.b16 %v1303
      %v1543 = vunpack.c.l.b16 %v1304
      %v1544 = vunpack.c.l.b16 %v1305
      %v1545 = vunpack.c.l.b16 %v1306
      %v1546 = vunpack.c.l.b16 %v1307
      %v1547 = vunpack.c.l.b16 %v1308
      %v1548 = vunpack.c.l.b16 %v1309
      %v1549 = vunpack.c.l.b16 %v1310
      %v1550 = vunpack.c.l.b16 %v1311
      %v1551 = vunpack.c.l.b16 %v1312
      %v1552 = vunpack.c.l.b16 %v1313
      %v1553 = vunpack.c.l.b16 %v1314
      %v1554 = vunpack.c.l.b16 %v1315
      %v1555 = vunpack.c.l.b16 %v1316
      %v1556 = vunpack.c.l.b16 %v1317
      %v1557 = vunpack.c.l.b16 %v1318
      %v1558 = vunpack.c.l.b16 %v1319
      %v1559 = vunpack.c.l.b16 %v1320
      %v1560 = vunpack.c.l.b16 %v1321
      %v1561 = vunpack.c.l.b16 %v1322
      %v1562 = vunpack.c.l.b16 %v1323
      %v1563 = vunpack.c.l.b16 %v1324
      %v1564 = vunpack.c.l.b16 %v1325
      %v1565 = vunpack.c.l.b16 %v1326
      %v1566 = vunpack.c.l.b16 %v1327
      %v1567 = vunpack.c.l.b16 %v1328
      %v1568 = vunpack.c.l.b16 %v1329
      %v1569 = vunpack.c.l.b16 %v1330
      %v1570 = vunpack.c.l.b16 %v1331
      %v1571 = vunpack.c.l.b16 %v1332
      %v1572 = vunpack.c.l.b16 %v1333
      %v1573 = vunpack.c.l.b16 %v1334
      %v1574 = vunpack.c.l.b16 %v1335
      %v1575 = vunpack.c.l.b16 %v1336
      %v1576 = vunpack.c.l.b16 %v1337
      %v1577 = vpack.c.b16 %v1514, %v1513
      %v1578 = vpack.c.b16 %v1516, %v1515
      %v1579 = vpack.c.b16 %v1518, %v1517
      %v1580 = vpack.c.b16 %v1520, %v1519
      %v1581 = vpack.c.b16 %v1522, %v1521
      %v1582 = vpack.c.b16 %v1524, %v1523
      %v1583 = vpack.c.b16 %v1526, %v1525
      %v1584 = vpack.c.b16 %v1528, %v1527
      %v1585 = vpack.c.b16 %v1530, %v1529
      %v1586 = vpack.c.b16 %v1532, %v1531
      %v1587 = vpack.c.b16 %v1534, %v1533
      %v1588 = vpack.c.b16 %v1536, %v1535
      %v1589 = vpack.c.b16 %v1538, %v1537
      %v1590 = vpack.c.b16 %v1540, %v1539
      %v1591 = vpack.c.b16 %v1542, %v1541
      %v1592 = vpack.c.b16 %v1544, %v1543
      %v1593 = vpack.c.b16 %v1546, %v1545
      %v1594 = vpack.c.b16 %v1548, %v1547
      %v1595 = vpack.c.b16 %v1550, %v1549
      %v1596 = vpack.c.b16 %v1552, %v1551
      %v1597 = vpack.c.b16 %v1554, %v1553
      %v1598 = vpack.c.b16 %v1556, %v1555
      %v1599 = vpack.c.b16 %v1558, %v1557
      %v1600 = vpack.c.b16 %v1560, %v1559
      %v1601 = vpack.c.b16 %v1562, %v1561
      %v1602 = vpack.c.b16 %v1564, %v1563
      %v1603 = vpack.c.b16 %v1566, %v1565
      %v1604 = vpack.c.b16 %v1568, %v1567
      %v1605 = vpack.c.b16 %v1570, %v1569
      %v1606 = vpack.c.b16 %v1572, %v1571
      %v1607 = vpack.c.b16 %v1574, %v1573
      %v1608 = vpack.c.b16 %v1576, %v1575
      %1641 = vmatpush.bf16.msra.mxu0 %v1584
      %1642 = vmatpush.bf16.msra.mxu0 %v1583
      %1643 = vmatpush.bf16.msra.mxu0 %v1582
      %1644 = vmatpush.bf16.msra.mxu0 %v1581
      %1645 = vmatpush.bf16.msra.mxu0 %v1580
      %1646 = vmatpush.bf16.msra.mxu0 %v1579
      %1647 = vmatpush.bf16.msra.mxu0 %v1578
      %1648 = vmatpush.bf16.msra.mxu0 %v1577
      %1649 = vmatmul.bf16.gmra.mxu0 %v1421
      %v1650 = vpop.f32.mrf.mxu0
      %v1651 = vadd.f32 %v1448, %v1650
      %v1652 = vpop.f32.mrf.mxu0
      %1653 = vdwg.mxu0
      %1654 = vmatpush.bf16.msra.mxu0 %v1592
      %1655 = vmatpush.bf16.msra.mxu0 %v1591
      %1656 = vmatpush.bf16.msra.mxu0 %v1590
      %1657 = vmatpush.bf16.msra.mxu0 %v1589
      %1658 = vmatpush.bf16.msra.mxu0 %v1588
      %1659 = vmatpush.bf16.msra.mxu0 %v1587
      %1660 = vmatpush.bf16.msra.mxu0 %v1586
      %1661 = vmatpush.bf16.msra.mxu0 %v1585
      %1662 = vmatmul.bf16.gmra.mxu0 %v1429
      %v1663 = vpop.f32.mrf.mxu0
      %v1664 = vadd.f32 %v1651, %v1663
      %v1665 = vpop.f32.mrf.mxu0
      %1666 = vdwg.mxu0
      %1667 = vmatpush.bf16.msra.mxu0 %v1600
      %1668 = vmatpush.bf16.msra.mxu0 %v1599
      %1669 = vmatpush.bf16.msra.mxu0 %v1598
      %1670 = vmatpush.bf16.msra.mxu0 %v1597
      %1671 = vmatpush.bf16.msra.mxu0 %v1596
      %1672 = vmatpush.bf16.msra.mxu0 %v1595
      %1673 = vmatpush.bf16.msra.mxu0 %v1594
      %1674 = vmatpush.bf16.msra.mxu0 %v1593
      %1675 = vmatmul.bf16.gmra.mxu0 %v1437
      %v1676 = vpop.f32.mrf.mxu0
      %v1677 = vadd.f32 %v1664, %v1676
      %v1678 = vpop.f32.mrf.mxu0
      %1679 = vdwg.mxu0
      %1680 = vmatpush.bf16.msra.mxu0 %v1608
      %1681 = vmatpush.bf16.msra.mxu0 %v1607
      %1682 = vmatpush.bf16.msra.mxu0 %v1606
      %1683 = vmatpush.bf16.msra.mxu0 %v1605
      %1684 = vmatpush.bf16.msra.mxu0 %v1604
      %1685 = vmatpush.bf16.msra.mxu0 %v1603
      %1686 = vmatpush.bf16.msra.mxu0 %v1602
      %1687 = vmatpush.bf16.msra.mxu0 %v1601
      %1688 = vmatmul.bf16.gmra.mxu0 %v1445
      %v1689 = vpop.f32.mrf.mxu0
      %v1690 = vadd.f32 %v1677, %v1689
      %v1691 = vpop.f32.mrf.mxu0
      %1692 = vdwg.mxu0
      %v1693 = vmax.f32 %v1690, 0.0
      %v1694 = vld [vmem:[%s2 + $0x160] sm:$0xf]
      %v1695 = vld [vmem:[%s2 + $0x164] sm:$0xf]
      %v1696 = vld [vmem:[%s2 + $0x168] sm:$0xf]
      %v1697 = vld [vmem:[%s2 + $0x16c] sm:$0xf]
      %v1698 = vld [vmem:[%s2 + $0x170] sm:$0xf]
      %v1699 = vld [vmem:[%s2 + $0x174] sm:$0xf]
      %v1700 = vld [vmem:[%s2 + $0x178] sm:$0xf]
      %v1701 = vld [vmem:[%s2 + $0x17c] sm:$0xf]
      %v1702 = vld [vmem:[%s210] sm:$0xff]
      %v1703 = vadd.f32 %v1693, %v1702
      %v1704 = vpack.c.bf16 %v1703, %v1703
      %v1705 = vld [vmem:[%s3 + $0x3] sm:$0x1]
      %v1706 = vperm.slane %v1705, 0
      %v1711 = vunpack.c.l.b16 %v1694
      %v1712 = vunpack.c.l.b16 %v1695
      %v1713 = vunpack.c.l.b16 %v1696
      %v1714 = vunpack.c.l.b16 %v1697
      %v1715 = vpack.c.b16 %v1712, %v1711
      %v1716 = vpack.c.b16 %v1714, %v1713
      %v1720 = vsel %vm615, %v1704, 0
      %1722 = vmatpush.bf16.msra.mxu0 0
      %1723 = vmatpush.bf16.msra.mxu0 0
      %1724 = vmatpush.bf16.msra.mxu0 0
      %1725 = vmatpush.bf16.msra.mxu0 0
      %1726 = vmatpush.bf16.msra.mxu0 0
      %1727 = vmatpush.bf16.msra.mxu0 0
      %1728 = vmatpush.bf16.msra.mxu0 %v1716
      %1729 = vmatpush.bf16.msra.mxu0 %v1715
      %1730 = vmatmul.bf16.gmra.mxu0 %v1720
      %v1731 = vpop.f32.mrf.mxu0
      %v1732 = vadd.f32 %v1706, %v1731
      %v1733 = vpop.f32.mrf.mxu0
      %1734 = vdwg.mxu0
      %v1735 = vmax.f32 %v1732, 0.0
      %v1736 = vpack.c.bf16 %v1735, %v1735
      %v1737 = vld [vmem:[%s3 + $0x4] sm:$0x1]
      %v1738 = vperm.slane %v1737, 0
      %v1743 = vunpack.c.l.b16 %v1698
      %v1744 = vunpack.c.l.b16 %v1699
      %v1745 = vunpack.c.l.b16 %v1700
      %v1746 = vunpack.c.l.b16 %v1701
      %v1747 = vpack.c.b16 %v1744, %v1743
      %v1748 = vpack.c.b16 %v1746, %v1745
      %v1752 = vsel %vm615, %v1736, 0
      %1754 = vmatpush.bf16.msra.mxu0 0
      %1755 = vmatpush.bf16.msra.mxu0 0
      %1756 = vmatpush.bf16.msra.mxu0 0
      %1757 = vmatpush.bf16.msra.mxu0 0
      %1758 = vmatpush.bf16.msra.mxu0 0
      %1759 = vmatpush.bf16.msra.mxu0 0
      %1760 = vmatpush.bf16.msra.mxu0 %v1748
      %1761 = vmatpush.bf16.msra.mxu0 %v1747
      %1762 = vmatmul.bf16.gmra.mxu0 %v1752
      %v1763 = vpop.f32.mrf.mxu0
      %v1764 = vadd.f32 %v1738, %v1763
      %v1765 = vpop.f32.mrf.mxu0
      %1766 = vdwg.mxu0
      %vm1767 = vcmask 15360
      %1768 = vst.msk [vmem:[%s214] sm:$0xff] %vm1767, %v1764
      %p1769 = scmp.lt.s32.totalorder %s15, 1
      %s1770 = scalar_select %p1769, %s15, 1
      %s1771 = smul.addr %s1770, 8
      %s1772 = scalar_lea.vmem %s4, %s1771
      // Predicated region
      $region37: #{cnnbase_forward.1} parent=35 // pred_check
        %p1773 = pneg %p127
      $region38: #{cnnbase_forward.1} parent=35 // pred_check_branch
        %1775 = sbr.rel (%p1773) target = $region40
      $region39: #{cnnbase_forward.1} parent=35 // pred_region
        _
      $region40: #{cnnbase_forward.1} parent=35 // pred_fallthru
        _
    $region36: #{cnnbase_forward.1} parent=5 // pred_fallthru
      _
    %p1776 = scmp.le.s32.totalorder 2, %s10
    // Predicated region
    $region41: #{cnnbase_forward.1} parent=5 // pred_check
      %p1777 = pneg %p1776
    $region42: #{cnnbase_forward.1} parent=5 // pred_check_branch
      %1779 = sbr.rel (%p1777) target = $region44
    $region43: #{cnnbase_forward.1} parent=5 // pred_region
      %s1780 = ssub.s32 %s10, 2
      // Predicated region
      $region45: #{cnnbase_forward.1} parent=43 // pred_check
        %p1781 = pneg %p133
      $region46: #{cnnbase_forward.1} parent=43 // pred_check_branch
        %1783 = sbr.rel (%p1781) target = $region48
      $region47: #{cnnbase_forward.1} parent=43 // pred_region
        %p1784 = scmp.lt.s32.totalorder %s16, 1
        %s1785 = scalar_select %p1784, %s16, 1
        %s1786 = smul.addr %s1785, 8
        %s1787 = scalar_lea.vmem %s4, %s1786
      $region48: #{cnnbase_forward.1} parent=43 // pred_fallthru
        _
    $region44: #{cnnbase_forward.1} parent=5 // pred_fallthru
      _
  $region6: #{cnnbase_forward.1} parent=0 // loop_footer
    %s14 = sadd.s32 1, %s10
  $region7: #{cnnbase_forward.1} parent=0 // loop_footer_branch
    %9 = sbr.rel target = $region3
  $region8: #{cnnbase_forward.1} parent=0 // loop_exit
    _

</llo_original>
